<compile_context>
chip_gen: v7x
topology: tpu7x:2x2x1
jax: 0.10.0
libtpu: 0.0.40
codegen_flags: <defaults>
</compile_context>

<pallas_src>
import functools

import jax
import jax.numpy as jnp
from jax.experimental import pallas as pl
from jax.experimental.pallas import tpu as pltpu


# ----------------------------------------------------------------------------
# Fused Pallas kernel: one batch element per grid step, channels-first layout.
# ----------------------------------------------------------------------------
def _token_transformer2d_kernel(
        x_ref, pos_ref, wqkv_ref, bqkv_ref, wp_ref, bp_ref,
        w1_ref, b1_ref, w2_ref, b2_ref, o_ref,
        *, num_heads, head_dim, eps, q_tile):
    f32 = jnp.float32
    bf16 = jnp.bfloat16
    in_dim = num_heads * head_dim
    N = x_ref.shape[-1]
    n_tiles = N // q_tile
    nt = (((1,), (1,)), ((), ()))        # A @ B^T (contraction on both minor dims)

    # reshape_out + learned additive position embedding
    x = x_ref[0].astype(f32) + pos_ref[...].astype(f32)               # (C, N)

    # norm1: standardization only (gamma/beta folded into wqkv/bqkv by wrapper)
    mu = jnp.mean(x, axis=0, keepdims=True)
    var = jnp.mean((x - mu) ** 2, axis=0, keepdims=True)
    xn = (x - mu) * jax.lax.rsqrt(var + eps)                          # (C, N)

    # fused qkv projection; attention scale pre-folded into the q rows
    qkv = jnp.dot(wqkv_ref[...], xn, preferred_element_type=f32) + bqkv_ref[...]
    q_t = qkv[0 * in_dim:1 * in_dim, :]                               # (in_dim, N)
    k_t = qkv[1 * in_dim:2 * in_dim, :]
    v_t = qkv[2 * in_dim:3 * in_dim, :]                               # f32, reused for skip

    q_nt = q_t.T                                  # (N, in_dim): one transpose for all heads
    ones_row = jnp.ones((1, N), dtype=bf16)       # denominator row for deferred softmax

    head_ctx = []
    for h in range(num_heads):                                        # static unroll
        r = slice(h * head_dim, (h + 1) * head_dim)
        k_h = k_t[r, :].astype(bf16)                                  # (hd, N)
        v_h = v_t[r, :].astype(bf16)                                  # (hd, N)
        tiles = []
        for t in range(n_tiles):                                      # static unroll
            c = slice(t * q_tile, (t + 1) * q_tile)                   # 128-aligned
            q_blk = q_nt[c, r].astype(bf16)                           # (TQ, hd)
            s = jnp.dot(q_blk, k_h, preferred_element_type=f32)       # (TQ, N) f32
            s = s - jnp.max(s, axis=-1, keepdims=True)
            p = jnp.exp(s).astype(bf16)                               # un-normalized probs
            # context + denominator, both lane-dense, un-normalized (MXU, f32 acc)
            ctx_u = jax.lax.dot_general(v_h, p, nt,
                                        preferred_element_type=f32)   # (hd, TQ)
            denom = jax.lax.dot_general(ones_row, p, nt,
                                        preferred_element_type=f32)   # (1, TQ)
            tiles.append(ctx_u * pl.reciprocal(denom, approx=True))   # deferred softmax norm
        head_ctx.append(tiles[0] if n_tiles == 1
                        else jnp.concatenate(tiles, axis=1))          # (hd, N)
    ctx_t = (head_ctx[0] if num_heads == 1
             else jnp.concatenate(head_ctx, axis=0))                  # (in_dim, N)

    # proj + v skip (sr_ratio == 1 branch of Attention.forward)
    a_t = v_t + jnp.dot(wp_ref[...], ctx_t, preferred_element_type=f32) + bp_ref[...]

    # norm2 (affine folded into w1/b1) + MLP (fc1 -> ReLU -> fc2) + residual
    mu2 = jnp.mean(a_t, axis=0, keepdims=True)
    var2 = jnp.mean((a_t - mu2) ** 2, axis=0, keepdims=True)
    an = (a_t - mu2) * jax.lax.rsqrt(var2 + eps)
    h1 = jnp.maximum(jnp.dot(w1_ref[...], an, preferred_element_type=f32)
                     + b1_ref[...], 0.0)                              # nn.ReLU
    y = jnp.dot(w2_ref[...], h1, preferred_element_type=f32) + b2_ref[...]

    o_ref[0] = (a_t + y).astype(o_ref.dtype)                          # (in_dim, N), lane dense


# ----------------------------------------------------------------------------
# Trace-time weight folding (exact): norm1 affine + attention scale -> qkv,
# norm2 affine -> fc1.
# ----------------------------------------------------------------------------
def _fold_params(params, *, num_heads):
    f32 = jnp.float32
    in_dim = params["wproj"].shape[0]
    head_dim = in_dim // num_heads
    scale = head_dim ** -0.5

    g1 = params["norm1_g"][:, 0].astype(f32)
    be1 = params["norm1_b"][:, 0].astype(f32)
    wqkv = params["wqkv"].astype(f32)                  # (3*in_dim, C)
    w_eff = wqkv * g1[None, :]                         # fold gamma1
    b_eff = wqkv @ be1                                 # fold beta1 -> bias
    w_eff = jnp.concatenate([w_eff[:in_dim] * scale, w_eff[in_dim:]], axis=0)
    b_eff = jnp.concatenate([b_eff[:in_dim] * scale, b_eff[in_dim:]], axis=0)

    g2 = params["norm2_g"][:, 0].astype(f32)
    be2 = params["norm2_b"][:, 0].astype(f32)
    w1 = params["w1"].astype(f32)
    w1_eff = w1 * g2[None, :]                          # fold gamma2
    b1_eff = params["b1"][:, 0].astype(f32) + w1 @ be2 # fold beta2

    return dict(
        pos=params["pos"].astype(f32),
        wqkv=w_eff, bqkv=b_eff[:, None],
        wproj=params["wproj"].astype(f32), bproj=params["bproj"].astype(f32),
        w1=w1_eff, b1=b1_eff[:, None],
        w2=params["w2"].astype(f32), b2=params["b2"].astype(f32),
    )


# ----------------------------------------------------------------------------
# Wrapper: NCHW in -> (B, in_dim, H, W) out, matching Token_transformer2d.forward
# ----------------------------------------------------------------------------
def token_transformer2d_forward(x_nchw, params, *, num_heads):
    B, C, H, W = x_nchw.shape
    N = H * W
    in_dim = params["wproj"].shape[0]
    hidden = params["w1"].shape[0]
    head_dim = in_dim // num_heads
    q_tile = 128 if N % 128 == 0 else (64 if N % 64 == 0 else N)

    fp = _fold_params(params, num_heads=num_heads)
    x_cn = x_nchw.reshape(B, C, N)              # reshape_out is free channels-first

    kernel = functools.partial(
        _token_transformer2d_kernel, num_heads=num_heads, head_dim=head_dim,
        eps=1e-5, q_tile=q_tile)

    full = lambda b: (0, 0)
    out = pl.pallas_call(
        kernel,
        out_shape=jax.ShapeDtypeStruct((B, in_dim, N), x_nchw.dtype),
        grid=(B,),
        in_specs=[
            pl.BlockSpec((1, C, N), lambda b: (b, 0, 0)),     # x (lane dense)
            pl.BlockSpec((C, N), full),                       # pos embed (C, N)
            pl.BlockSpec((3 * in_dim, C), full),              # qkv weight (folded)
            pl.BlockSpec((3 * in_dim, 1), full),              # qkv bias   (folded)
            pl.BlockSpec((in_dim, in_dim), full),             # proj weight
            pl.BlockSpec((in_dim, 1), full),                  # proj bias
            pl.BlockSpec((hidden, in_dim), full),             # fc1 weight (folded)
            pl.BlockSpec((hidden, 1), full),                  # fc1 bias   (folded)
            pl.BlockSpec((in_dim, hidden), full),             # fc2 weight
            pl.BlockSpec((in_dim, 1), full),                  # fc2 bias
        ],
        out_specs=pl.BlockSpec((1, in_dim, N), lambda b: (b, 0, 0)),
        compiler_params=pltpu.CompilerParams(
            dimension_semantics=("parallel",)),   # both v7x TCs; serial loop on 1-TC chips
    )(x_cn, fp["pos"], fp["wqkv"], fp["bqkv"], fp["wproj"], fp["bproj"],
      fp["w1"], fp["b1"], fp["w2"], fp["b2"])

    return out.reshape(B, in_dim, H, W)         # reshape_back is free channels-first


# ----------------------------------------------------------------------------
# Pure-JAX reference (channels-last, mirrors the PyTorch code) for validation.
# ----------------------------------------------------------------------------
def token_transformer2d_reference(x_nchw, params, *, num_heads):
    B, C, H, W = x_nchw.shape
    N = H * W
    in_dim = params["wproj"].shape[0]
    hd = in_dim // num_heads

    x = jnp.transpose(x_nchw, (0, 2, 3, 1)).reshape(B, N, C)          # reshape_out
    x = x + params["pos"].T[None]                                     # pos embedding

    def ln(t, g, b, eps=1e-5):
        mu = jnp.mean(t, -1, keepdims=True)
        var = jnp.mean((t - mu) ** 2, -1, keepdims=True)
        return (t - mu) / jnp.sqrt(var + eps) * g + b

    xn = ln(x, params["norm1_g"][:, 0], params["norm1_b"][:, 0])
    qkv = jnp.einsum("bnc,oc->bno", xn, params["wqkv"])
    q, k, v = qkv[..., :in_dim], qkv[..., in_dim:2 * in_dim], qkv[..., 2 * in_dim:]

    def heads(t):
        return t.reshape(B, N, num_heads, hd).transpose(0, 2, 1, 3)

    attn = jnp.einsum("bhnd,bhmd->bhnm", heads(q), heads(k)) * hd ** -0.5
    attn = jax.nn.softmax(attn, axis=-1)
    ctx = jnp.einsum("bhnm,bhmd->bhnd", attn, heads(v))
    ctx = ctx.transpose(0, 2, 1, 3).reshape(B, N, in_dim)
    proj = jnp.einsum("bni,oi->bno", ctx, params["wproj"]) + params["bproj"][:, 0]
    a = v + proj                                                      # v skip
    an = ln(a, params["norm2_g"][:, 0], params["norm2_b"][:, 0])
    h1 = jnp.maximum(jnp.einsum("bni,hi->bnh", an, params["w1"]) + params["b1"][:, 0], 0.0)
    y = jnp.einsum("bnh,oh->bno", h1, params["w2"]) + params["b2"][:, 0]
    out = a + y
    return jnp.transpose(out, (0, 2, 1)).reshape(B, in_dim, H, W)     # reshape_back


# ----------------------------------------------------------------------------
# Main: deterministic synthetic params + example input
# ----------------------------------------------------------------------------
if __name__ == "__main__":
    B = 2
    dim = 8                    # input channels C
    in_dim = 16                # attention output channels
    num_heads = 2              # head_dim = 8 -> sublane-aligned head slices
    H = W = 16
    N = H * W                  # 256 tokens -> lane dense, 2 query tiles of 128
    mlp_hidden = int(in_dim * 1.0)   # mlp_ratio = 1.0

    key = jax.random.PRNGKey(0)
    ks = jax.random.split(key, 16)
    nrm = lambda k_, shape, s=0.05: (s * jax.random.normal(k_, shape)).astype(jnp.float32)

    x = nrm(ks[0], (B, dim, H, W), s=1.0)

    # All Linear weights kept in PyTorch (out_features, in_features) layout; the
    # kernel is channels-first, so they are used directly (y_t = W @ x_t + b).
    # TODO(synk): position_embedding class body not provided; implemented as the
    # standard additive learned (N, dim) table (stored transposed as (dim, N)).
    params = {
        "pos": nrm(ks[1], (dim, N), s=0.05),
        "norm1_g": 1.0 + nrm(ks[9], (dim, 1), s=0.1),      # non-trivial affine to
        "norm1_b": nrm(ks[10], (dim, 1), s=0.05),          # exercise the folding
        "wqkv": nrm(ks[2], (3 * in_dim, dim)),             # qkv_bias = False
        "wproj": nrm(ks[3], (in_dim, in_dim)),
        "bproj": nrm(ks[4], (in_dim, 1)),
        "norm2_g": 1.0 + nrm(ks[11], (in_dim, 1), s=0.1),
        "norm2_b": nrm(ks[12], (in_dim, 1), s=0.05),
        "w1": nrm(ks[5], (mlp_hidden, in_dim)),
        "b1": nrm(ks[6], (mlp_hidden, 1)),
        "w2": nrm(ks[7], (in_dim, mlp_hidden)),
        "b2": nrm(ks[8], (in_dim, 1)),
    }

    fwd = jax.jit(functools.partial(token_transformer2d_forward, num_heads=num_heads))
    out = jax.block_until_ready(fwd(x, params))

    assert out.shape == (B, in_dim, H, W), out.shape
    assert bool(jnp.all(jnp.isfinite(out)))

    ref = token_transformer2d_reference(x, params, num_heads=num_heads)
    err = float(jnp.max(jnp.abs(out - ref)))
    assert bool(jnp.allclose(out, ref, atol=5e-3, rtol=5e-2)), err

    print("KERNEL_OK")
</pallas_src>

<mosaic_0001>
module attributes {stable_mosaic.version = 11 : i64} {
  func.func @_token_transformer2d_kernel(%arg0: i32, %arg1: memref<1x8x256xf32, #tpu.memory_space<vmem>>, %arg2: memref<8x256xf32, #tpu.memory_space<vmem>>, %arg3: memref<48x8xf32, #tpu.memory_space<vmem>>, %arg4: memref<48x1xf32, #tpu.memory_space<vmem>>, %arg5: memref<16x16xf32, #tpu.memory_space<vmem>>, %arg6: memref<16x1xf32, #tpu.memory_space<vmem>>, %arg7: memref<16x16xf32, #tpu.memory_space<vmem>>, %arg8: memref<16x1xf32, #tpu.memory_space<vmem>>, %arg9: memref<16x16xf32, #tpu.memory_space<vmem>>, %arg10: memref<16x1xf32, #tpu.memory_space<vmem>>, %arg11: memref<1x16x256xf32, #tpu.memory_space<vmem>>) attributes {dimension_semantics = [#tpu.dimension_semantics<parallel>], iteration_bounds = array<i64: 2>, scalar_prefetch = 0 : i64, scratch_operands = 0 : i64, tpu.core_type = #tpu.core_type<tc>, window_params = [{transform_indices = @transform_0, window_bounds = array<i64: 1, 8, 256>}, {pipeline_mode = #tpu.pipeline_mode<synchronous>, transform_indices = @transform_1, window_bounds = array<i64: 8, 256>}, {pipeline_mode = #tpu.pipeline_mode<synchronous>, transform_indices = @transform_2, window_bounds = array<i64: 48, 8>}, {pipeline_mode = #tpu.pipeline_mode<synchronous>, transform_indices = @transform_3, window_bounds = array<i64: 48, 1>}, {pipeline_mode = #tpu.pipeline_mode<synchronous>, transform_indices = @transform_4, window_bounds = array<i64: 16, 16>}, {pipeline_mode = #tpu.pipeline_mode<synchronous>, transform_indices = @transform_5, window_bounds = array<i64: 16, 1>}, {pipeline_mode = #tpu.pipeline_mode<synchronous>, transform_indices = @transform_6, window_bounds = array<i64: 16, 16>}, {pipeline_mode = #tpu.pipeline_mode<synchronous>, transform_indices = @transform_7, window_bounds = array<i64: 16, 1>}, {pipeline_mode = #tpu.pipeline_mode<synchronous>, transform_indices = @transform_8, window_bounds = array<i64: 16, 16>}, {pipeline_mode = #tpu.pipeline_mode<synchronous>, transform_indices = @transform_9, window_bounds = array<i64: 16, 1>}, {transform_indices = @transform_10, window_bounds = array<i64: 1, 16, 256>}]} {
    %c0 = arith.constant 0 : index
    %c0_0 = arith.constant 0 : index
    %c0_1 = arith.constant 0 : index
    %0 = vector.load %arg1[%c0, %c0_0, %c0_1] : memref<1x8x256xf32, #tpu.memory_space<vmem>>, vector<1x8x256xf32>
    %1 = vector.shape_cast %0 : vector<1x8x256xf32> to vector<8x256xf32>
    %c0_2 = arith.constant 0 : index
    %c0_3 = arith.constant 0 : index
    %2 = vector.load %arg2[%c0_2, %c0_3] : memref<8x256xf32, #tpu.memory_space<vmem>>, vector<8x256xf32>
    %3 = arith.addf %1, %2 : vector<8x256xf32>
    %cst = arith.constant dense<0.000000e+00> : vector<256xf32>
    %4 = vector.multi_reduction <add>, %3, %cst [0] : vector<8x256xf32> to vector<256xf32>
    %5 = vector.shape_cast %4 : vector<256xf32> to vector<1x256xf32>
    %cst_4 = arith.constant 8.000000e+00 : f32
    %6 = vector.broadcast %cst_4 : f32 to vector<1x256xf32>
    %7 = arith.divf %5, %6 : vector<1x256xf32>
    %8 = vector.broadcast %7 : vector<1x256xf32> to vector<8x256xf32>
    %9 = arith.subf %3, %8 : vector<8x256xf32>
    %10 = arith.mulf %9, %9 : vector<8x256xf32>
    %cst_5 = arith.constant dense<0.000000e+00> : vector<256xf32>
    %11 = vector.multi_reduction <add>, %10, %cst_5 [0] : vector<8x256xf32> to vector<256xf32>
    %12 = vector.shape_cast %11 : vector<256xf32> to vector<1x256xf32>
    %cst_6 = arith.constant 8.000000e+00 : f32
    %13 = vector.broadcast %cst_6 : f32 to vector<1x256xf32>
    %14 = arith.divf %12, %13 : vector<1x256xf32>
    %15 = vector.broadcast %7 : vector<1x256xf32> to vector<8x256xf32>
    %16 = arith.subf %3, %15 : vector<8x256xf32>
    %cst_7 = arith.constant 9.99999974E-6 : f32
    %17 = vector.broadcast %cst_7 : f32 to vector<1x256xf32>
    %18 = arith.addf %14, %17 : vector<1x256xf32>
    %19 = math.rsqrt %18 : vector<1x256xf32>
    %20 = vector.broadcast %19 : vector<1x256xf32> to vector<8x256xf32>
    %21 = arith.mulf %16, %20 : vector<8x256xf32>
    %c0_8 = arith.constant 0 : index
    %c0_9 = arith.constant 0 : index
    %22 = vector.load %arg3[%c0_8, %c0_9] : memref<48x8xf32, #tpu.memory_space<vmem>>, vector<48x8xf32>
    %cst_10 = arith.constant dense<0.000000e+00> : vector<48x256xf32>
    %23 = tpu.matmul %22, %21, %cst_10 {dimension_numbers = #tpu.dot_dimension_numbers<[1], [0], [0], [1], [0, 0, 1, 1], [], []>} : vector<48x8xf32>, vector<8x256xf32>, vector<48x256xf32> -> vector<48x256xf32>
    %c0_11 = arith.constant 0 : index
    %c0_12 = arith.constant 0 : index
    %24 = vector.load %arg4[%c0_11, %c0_12] : memref<48x1xf32, #tpu.memory_space<vmem>>, vector<48x1xf32>
    %25 = vector.broadcast %24 : vector<48x1xf32> to vector<48x256xf32>
    %26 = arith.addf %23, %25 : vector<48x256xf32>
    %27 = vector.extract_strided_slice %26 {offsets = [0, 0], sizes = [16, 256], strides = [1, 1]} : vector<48x256xf32> to vector<16x256xf32>
    %28 = vector.extract_strided_slice %26 {offsets = [16, 0], sizes = [16, 256], strides = [1, 1]} : vector<48x256xf32> to vector<16x256xf32>
    %29 = vector.extract_strided_slice %26 {offsets = [32, 0], sizes = [16, 256], strides = [1, 1]} : vector<48x256xf32> to vector<16x256xf32>
    %30 = tpu.transpose %27, [1, 0] : vector<16x256xf32> -> vector<256x16xf32>
    %cst_13 = arith.constant 1.000000e+00 : bf16
    %31 = vector.broadcast %cst_13 : bf16 to vector<1x256xbf16>
    %32 = vector.extract_strided_slice %28 {offsets = [0, 0], sizes = [8, 256], strides = [1, 1]} : vector<16x256xf32> to vector<8x256xf32>
    %33 = arith.truncf %32 : vector<8x256xf32> to vector<8x256xbf16>
    %34 = vector.extract_strided_slice %29 {offsets = [0, 0], sizes = [8, 256], strides = [1, 1]} : vector<16x256xf32> to vector<8x256xf32>
    %35 = arith.truncf %34 : vector<8x256xf32> to vector<8x256xbf16>
    %36 = vector.extract_strided_slice %30 {offsets = [0, 0], sizes = [128, 8], strides = [1, 1]} : vector<256x16xf32> to vector<128x8xf32>
    %37 = arith.truncf %36 : vector<128x8xf32> to vector<128x8xbf16>
    %cst_14 = arith.constant dense<0.000000e+00> : vector<128x256xf32>
    %38 = tpu.matmul %37, %33, %cst_14 {dimension_numbers = #tpu.dot_dimension_numbers<[1], [0], [0], [1], [0, 0, 1, 1], [], []>} : vector<128x8xbf16>, vector<8x256xbf16>, vector<128x256xf32> -> vector<128x256xf32>
    %cst_15 = arith.constant dense<0xFF800000> : vector<128xf32>
    %39 = vector.multi_reduction <maximumf>, %38, %cst_15 [1] : vector<128x256xf32> to vector<128xf32>
    %40 = vector.shape_cast %39 : vector<128xf32> to vector<128x1xf32>
    %41 = vector.broadcast %40 : vector<128x1xf32> to vector<128x256xf32>
    %42 = arith.subf %38, %41 : vector<128x256xf32>
    %43 = math.exp %42 : vector<128x256xf32>
    %44 = arith.truncf %43 : vector<128x256xf32> to vector<128x256xbf16>
    %cst_16 = arith.constant dense<0.000000e+00> : vector<8x128xf32>
    %45 = tpu.matmul %35, %44, %cst_16 {dimension_numbers = #tpu.dot_dimension_numbers<[1], [1], [0], [0], [0, 0, 1, 0], [], []>} : vector<8x256xbf16>, vector<128x256xbf16>, vector<8x128xf32> -> vector<8x128xf32>
    %cst_17 = arith.constant dense<0.000000e+00> : vector<1x128xf32>
    %46 = tpu.matmul %31, %44, %cst_17 {dimension_numbers = #tpu.dot_dimension_numbers<[1], [1], [0], [0], [0, 0, 1, 0], [], []>} : vector<1x256xbf16>, vector<128x256xbf16>, vector<1x128xf32> -> vector<1x128xf32>
    %47 = tpu.reciprocal %46 {approx = true} : vector<1x128xf32> -> vector<1x128xf32>
    %48 = vector.broadcast %47 : vector<1x128xf32> to vector<8x128xf32>
    %49 = arith.mulf %45, %48 : vector<8x128xf32>
    %50 = vector.extract_strided_slice %30 {offsets = [128, 0], sizes = [128, 8], strides = [1, 1]} : vector<256x16xf32> to vector<128x8xf32>
    %51 = arith.truncf %50 : vector<128x8xf32> to vector<128x8xbf16>
    %cst_18 = arith.constant dense<0.000000e+00> : vector<128x256xf32>
    %52 = tpu.matmul %51, %33, %cst_18 {dimension_numbers = #tpu.dot_dimension_numbers<[1], [0], [0], [1], [0, 0, 1, 1], [], []>} : vector<128x8xbf16>, vector<8x256xbf16>, vector<128x256xf32> -> vector<128x256xf32>
    %cst_19 = arith.constant dense<0xFF800000> : vector<128xf32>
    %53 = vector.multi_reduction <maximumf>, %52, %cst_19 [1] : vector<128x256xf32> to vector<128xf32>
    %54 = vector.shape_cast %53 : vector<128xf32> to vector<128x1xf32>
    %55 = vector.broadcast %54 : vector<128x1xf32> to vector<128x256xf32>
    %56 = arith.subf %52, %55 : vector<128x256xf32>
    %57 = math.exp %56 : vector<128x256xf32>
    %58 = arith.truncf %57 : vector<128x256xf32> to vector<128x256xbf16>
    %cst_20 = arith.constant dense<0.000000e+00> : vector<8x128xf32>
    %59 = tpu.matmul %35, %58, %cst_20 {dimension_numbers = #tpu.dot_dimension_numbers<[1], [1], [0], [0], [0, 0, 1, 0], [], []>} : vector<8x256xbf16>, vector<128x256xbf16>, vector<8x128xf32> -> vector<8x128xf32>
    %cst_21 = arith.constant dense<0.000000e+00> : vector<1x128xf32>
    %60 = tpu.matmul %31, %58, %cst_21 {dimension_numbers = #tpu.dot_dimension_numbers<[1], [1], [0], [0], [0, 0, 1, 0], [], []>} : vector<1x256xbf16>, vector<128x256xbf16>, vector<1x128xf32> -> vector<1x128xf32>
    %61 = tpu.reciprocal %60 {approx = true} : vector<1x128xf32> -> vector<1x128xf32>
    %62 = vector.broadcast %61 : vector<1x128xf32> to vector<8x128xf32>
    %63 = arith.mulf %59, %62 : vector<8x128xf32>
    %64 = tpu.concatenate %49, %63 in 1 : vector<8x128xf32>, vector<8x128xf32> -> vector<8x256xf32>
    %65 = vector.extract_strided_slice %28 {offsets = [8, 0], sizes = [8, 256], strides = [1, 1]} : vector<16x256xf32> to vector<8x256xf32>
    %66 = arith.truncf %65 : vector<8x256xf32> to vector<8x256xbf16>
    %67 = vector.extract_strided_slice %29 {offsets = [8, 0], sizes = [8, 256], strides = [1, 1]} : vector<16x256xf32> to vector<8x256xf32>
    %68 = arith.truncf %67 : vector<8x256xf32> to vector<8x256xbf16>
    %69 = vector.extract_strided_slice %30 {offsets = [0, 8], sizes = [128, 8], strides = [1, 1]} : vector<256x16xf32> to vector<128x8xf32>
    %70 = arith.truncf %69 : vector<128x8xf32> to vector<128x8xbf16>
    %cst_22 = arith.constant dense<0.000000e+00> : vector<128x256xf32>
    %71 = tpu.matmul %70, %66, %cst_22 {dimension_numbers = #tpu.dot_dimension_numbers<[1], [0], [0], [1], [0, 0, 1, 1], [], []>} : vector<128x8xbf16>, vector<8x256xbf16>, vector<128x256xf32> -> vector<128x256xf32>
    %cst_23 = arith.constant dense<0xFF800000> : vector<128xf32>
    %72 = vector.multi_reduction <maximumf>, %71, %cst_23 [1] : vector<128x256xf32> to vector<128xf32>
    %73 = vector.shape_cast %72 : vector<128xf32> to vector<128x1xf32>
    %74 = vector.broadcast %73 : vector<128x1xf32> to vector<128x256xf32>
    %75 = arith.subf %71, %74 : vector<128x256xf32>
    %76 = math.exp %75 : vector<128x256xf32>
    %77 = arith.truncf %76 : vector<128x256xf32> to vector<128x256xbf16>
    %cst_24 = arith.constant dense<0.000000e+00> : vector<8x128xf32>
    %78 = tpu.matmul %68, %77, %cst_24 {dimension_numbers = #tpu.dot_dimension_numbers<[1], [1], [0], [0], [0, 0, 1, 0], [], []>} : vector<8x256xbf16>, vector<128x256xbf16>, vector<8x128xf32> -> vector<8x128xf32>
    %cst_25 = arith.constant dense<0.000000e+00> : vector<1x128xf32>
    %79 = tpu.matmul %31, %77, %cst_25 {dimension_numbers = #tpu.dot_dimension_numbers<[1], [1], [0], [0], [0, 0, 1, 0], [], []>} : vector<1x256xbf16>, vector<128x256xbf16>, vector<1x128xf32> -> vector<1x128xf32>
    %80 = tpu.reciprocal %79 {approx = true} : vector<1x128xf32> -> vector<1x128xf32>
    %81 = vector.broadcast %80 : vector<1x128xf32> to vector<8x128xf32>
    %82 = arith.mulf %78, %81 : vector<8x128xf32>
    %83 = vector.extract_strided_slice %30 {offsets = [128, 8], sizes = [128, 8], strides = [1, 1]} : vector<256x16xf32> to vector<128x8xf32>
    %84 = arith.truncf %83 : vector<128x8xf32> to vector<128x8xbf16>
    %cst_26 = arith.constant dense<0.000000e+00> : vector<128x256xf32>
    %85 = tpu.matmul %84, %66, %cst_26 {dimension_numbers = #tpu.dot_dimension_numbers<[1], [0], [0], [1], [0, 0, 1, 1], [], []>} : vector<128x8xbf16>, vector<8x256xbf16>, vector<128x256xf32> -> vector<128x256xf32>
    %cst_27 = arith.constant dense<0xFF800000> : vector<128xf32>
    %86 = vector.multi_reduction <maximumf>, %85, %cst_27 [1] : vector<128x256xf32> to vector<128xf32>
    %87 = vector.shape_cast %86 : vector<128xf32> to vector<128x1xf32>
    %88 = vector.broadcast %87 : vector<128x1xf32> to vector<128x256xf32>
    %89 = arith.subf %85, %88 : vector<128x256xf32>
    %90 = math.exp %89 : vector<128x256xf32>
    %91 = arith.truncf %90 : vector<128x256xf32> to vector<128x256xbf16>
    %cst_28 = arith.constant dense<0.000000e+00> : vector<8x128xf32>
    %92 = tpu.matmul %68, %91, %cst_28 {dimension_numbers = #tpu.dot_dimension_numbers<[1], [1], [0], [0], [0, 0, 1, 0], [], []>} : vector<8x256xbf16>, vector<128x256xbf16>, vector<8x128xf32> -> vector<8x128xf32>
    %cst_29 = arith.constant dense<0.000000e+00> : vector<1x128xf32>
    %93 = tpu.matmul %31, %91, %cst_29 {dimension_numbers = #tpu.dot_dimension_numbers<[1], [1], [0], [0], [0, 0, 1, 0], [], []>} : vector<1x256xbf16>, vector<128x256xbf16>, vector<1x128xf32> -> vector<1x128xf32>
    %94 = tpu.reciprocal %93 {approx = true} : vector<1x128xf32> -> vector<1x128xf32>
    %95 = vector.broadcast %94 : vector<1x128xf32> to vector<8x128xf32>
    %96 = arith.mulf %92, %95 : vector<8x128xf32>
    %97 = tpu.concatenate %82, %96 in 1 : vector<8x128xf32>, vector<8x128xf32> -> vector<8x256xf32>
    %98 = tpu.concatenate %64, %97 in 0 : vector<8x256xf32>, vector<8x256xf32> -> vector<16x256xf32>
    %c0_30 = arith.constant 0 : index
    %c0_31 = arith.constant 0 : index
    %99 = vector.load %arg5[%c0_30, %c0_31] : memref<16x16xf32, #tpu.memory_space<vmem>>, vector<16x16xf32>
    %cst_32 = arith.constant dense<0.000000e+00> : vector<16x256xf32>
    %100 = tpu.matmul %99, %98, %cst_32 {dimension_numbers = #tpu.dot_dimension_numbers<[1], [0], [0], [1], [0, 0, 1, 1], [], []>} : vector<16x16xf32>, vector<16x256xf32>, vector<16x256xf32> -> vector<16x256xf32>
    %101 = arith.addf %29, %100 : vector<16x256xf32>
    %c0_33 = arith.constant 0 : index
    %c0_34 = arith.constant 0 : index
    %102 = vector.load %arg6[%c0_33, %c0_34] : memref<16x1xf32, #tpu.memory_space<vmem>>, vector<16x1xf32>
    %103 = vector.broadcast %102 : vector<16x1xf32> to vector<16x256xf32>
    %104 = arith.addf %101, %103 : vector<16x256xf32>
    %cst_35 = arith.constant dense<0.000000e+00> : vector<256xf32>
    %105 = vector.multi_reduction <add>, %104, %cst_35 [0] : vector<16x256xf32> to vector<256xf32>
    %106 = vector.shape_cast %105 : vector<256xf32> to vector<1x256xf32>
    %cst_36 = arith.constant 1.600000e+01 : f32
    %107 = vector.broadcast %cst_36 : f32 to vector<1x256xf32>
    %108 = arith.divf %106, %107 : vector<1x256xf32>
    %109 = vector.broadcast %108 : vector<1x256xf32> to vector<16x256xf32>
    %110 = arith.subf %104, %109 : vector<16x256xf32>
    %111 = arith.mulf %110, %110 : vector<16x256xf32>
    %cst_37 = arith.constant dense<0.000000e+00> : vector<256xf32>
    %112 = vector.multi_reduction <add>, %111, %cst_37 [0] : vector<16x256xf32> to vector<256xf32>
    %113 = vector.shape_cast %112 : vector<256xf32> to vector<1x256xf32>
    %cst_38 = arith.constant 1.600000e+01 : f32
    %114 = vector.broadcast %cst_38 : f32 to vector<1x256xf32>
    %115 = arith.divf %113, %114 : vector<1x256xf32>
    %116 = vector.broadcast %108 : vector<1x256xf32> to vector<16x256xf32>
    %117 = arith.subf %104, %116 : vector<16x256xf32>
    %cst_39 = arith.constant 9.99999974E-6 : f32
    %118 = vector.broadcast %cst_39 : f32 to vector<1x256xf32>
    %119 = arith.addf %115, %118 : vector<1x256xf32>
    %120 = math.rsqrt %119 : vector<1x256xf32>
    %121 = vector.broadcast %120 : vector<1x256xf32> to vector<16x256xf32>
    %122 = arith.mulf %117, %121 : vector<16x256xf32>
    %c0_40 = arith.constant 0 : index
    %c0_41 = arith.constant 0 : index
    %123 = vector.load %arg7[%c0_40, %c0_41] : memref<16x16xf32, #tpu.memory_space<vmem>>, vector<16x16xf32>
    %cst_42 = arith.constant dense<0.000000e+00> : vector<16x256xf32>
    %124 = tpu.matmul %123, %122, %cst_42 {dimension_numbers = #tpu.dot_dimension_numbers<[1], [0], [0], [1], [0, 0, 1, 1], [], []>} : vector<16x16xf32>, vector<16x256xf32>, vector<16x256xf32> -> vector<16x256xf32>
    %c0_43 = arith.constant 0 : index
    %c0_44 = arith.constant 0 : index
    %125 = vector.load %arg8[%c0_43, %c0_44] : memref<16x1xf32, #tpu.memory_space<vmem>>, vector<16x1xf32>
    %126 = vector.broadcast %125 : vector<16x1xf32> to vector<16x256xf32>
    %127 = arith.addf %124, %126 : vector<16x256xf32>
    %cst_45 = arith.constant 0.000000e+00 : f32
    %128 = vector.broadcast %cst_45 : f32 to vector<16x256xf32>
    %129 = arith.maximumf %127, %128 : vector<16x256xf32>
    %c0_46 = arith.constant 0 : index
    %c0_47 = arith.constant 0 : index
    %130 = vector.load %arg9[%c0_46, %c0_47] : memref<16x16xf32, #tpu.memory_space<vmem>>, vector<16x16xf32>
    %cst_48 = arith.constant dense<0.000000e+00> : vector<16x256xf32>
    %131 = tpu.matmul %130, %129, %cst_48 {dimension_numbers = #tpu.dot_dimension_numbers<[1], [0], [0], [1], [0, 0, 1, 1], [], []>} : vector<16x16xf32>, vector<16x256xf32>, vector<16x256xf32> -> vector<16x256xf32>
    %c0_49 = arith.constant 0 : index
    %c0_50 = arith.constant 0 : index
    %132 = vector.load %arg10[%c0_49, %c0_50] : memref<16x1xf32, #tpu.memory_space<vmem>>, vector<16x1xf32>
    %133 = vector.broadcast %132 : vector<16x1xf32> to vector<16x256xf32>
    %134 = arith.addf %131, %133 : vector<16x256xf32>
    %135 = arith.addf %104, %134 : vector<16x256xf32>
    %c0_51 = arith.constant 0 : index
    %c0_52 = arith.constant 0 : index
    %c0_53 = arith.constant 0 : index
    %136 = vector.load %arg11[%c0_51, %c0_52, %c0_53] : memref<1x16x256xf32, #tpu.memory_space<vmem>>, vector<1x16x256xf32>
    %137 = vector.shape_cast %136 : vector<1x16x256xf32> to vector<16x256xf32>
    %138 = vector.shape_cast %135 : vector<16x256xf32> to vector<1x16x256xf32>
    tpu.vector_store %arg11[%c0_51, %c0_52, %c0_53], %138 {strides = array<i32>} : memref<1x16x256xf32, #tpu.memory_space<vmem>>, vector<1x16x256xf32>,
    return
  }
  func.func @transform_0(%arg0: i32) -> (i32, i32, i32) {
    %c0_i32 = arith.constant 0 : i32
    %c0_i32_0 = arith.constant 0 : i32
    %c0_i32_1 = arith.constant 0 : i32
    return %arg0, %c0_i32, %c0_i32_0 : i32, i32, i32
  }
  func.func @transform_1(%arg0: i32) -> (i32, i32) {
    %c0_i32 = arith.constant 0 : i32
    %c0_i32_0 = arith.constant 0 : i32
    %c0_i32_1 = arith.constant 0 : i32
    return %c0_i32, %c0_i32_0 : i32, i32
  }
  func.func @transform_2(%arg0: i32) -> (i32, i32) {
    %c0_i32 = arith.constant 0 : i32
    %c0_i32_0 = arith.constant 0 : i32
    %c0_i32_1 = arith.constant 0 : i32
    return %c0_i32, %c0_i32_0 : i32, i32
  }
  func.func @transform_3(%arg0: i32) -> (i32, i32) {
    %c0_i32 = arith.constant 0 : i32
    %c0_i32_0 = arith.constant 0 : i32
    %c0_i32_1 = arith.constant 0 : i32
    return %c0_i32, %c0_i32_0 : i32, i32
  }
  func.func @transform_4(%arg0: i32) -> (i32, i32) {
    %c0_i32 = arith.constant 0 : i32
    %c0_i32_0 = arith.constant 0 : i32
    %c0_i32_1 = arith.constant 0 : i32
    return %c0_i32, %c0_i32_0 : i32, i32
  }
  func.func @transform_5(%arg0: i32) -> (i32, i32) {
    %c0_i32 = arith.constant 0 : i32
    %c0_i32_0 = arith.constant 0 : i32
    %c0_i32_1 = arith.constant 0 : i32
    return %c0_i32, %c0_i32_0 : i32, i32
  }
  func.func @transform_6(%arg0: i32) -> (i32, i32) {
    %c0_i32 = arith.constant 0 : i32
    %c0_i32_0 = arith.constant 0 : i32
    %c0_i32_1 = arith.constant 0 : i32
    return %c0_i32, %c0_i32_0 : i32, i32
  }
  func.func @transform_7(%arg0: i32) -> (i32, i32) {
    %c0_i32 = arith.constant 0 : i32
    %c0_i32_0 = arith.constant 0 : i32
    %c0_i32_1 = arith.constant 0 : i32
    return %c0_i32, %c0_i32_0 : i32, i32
  }
  func.func @transform_8(%arg0: i32) -> (i32, i32) {
    %c0_i32 = arith.constant 0 : i32
    %c0_i32_0 = arith.constant 0 : i32
    %c0_i32_1 = arith.constant 0 : i32
    return %c0_i32, %c0_i32_0 : i32, i32
  }
  func.func @transform_9(%arg0: i32) -> (i32, i32) {
    %c0_i32 = arith.constant 0 : i32
    %c0_i32_0 = arith.constant 0 : i32
    %c0_i32_1 = arith.constant 0 : i32
    return %c0_i32, %c0_i32_0 : i32, i32
  }
  func.func @transform_10(%arg0: i32) -> (i32, i32, i32) {
    %c0_i32 = arith.constant 0 : i32
    %c0_i32_0 = arith.constant 0 : i32
    %c0_i32_1 = arith.constant 0 : i32
    return %arg0, %c0_i32, %c0_i32_0 : i32, i32, i32
  }
}

</mosaic_0001>

<llo_original>
// kernel: token_transformer2d_forward.1
$region0: #{token_transformer2d_forward.1}
  #allocation0 [shape = 'u32[]', space=smem, size = 0x4, offset = 0x4, fixed_abs, tag = 'smem constant byte address 0x4 - core index']
  #allocation1 [shape = 'u32[144,128]{1,0:T(1,128)}', space=vmem, size = 0x12000, scoped, tag = 'internal scratch']
  %s0 = inlined_call_operand.vmem [shape: f32[2,8,256], index: 0, kind: input, shape index: {}]
  %s1 = inlined_call_operand.vmem [shape: f32[8,256], index: 1, kind: input, shape index: {}]
  %s2 = inlined_call_operand.vmem [shape: f32[48,8], index: 2, kind: input, shape index: {}]
  %s3 = inlined_call_operand.vmem [shape: f32[48,1], index: 3, kind: input, shape index: {}]
  %s4 = inlined_call_operand.vmem [shape: f32[16,16], index: 4, kind: input, shape index: {}]
  %s5 = inlined_call_operand.vmem [shape: f32[16,1], index: 5, kind: input, shape index: {}]
  %s6 = inlined_call_operand.vmem [shape: f32[16,16], index: 6, kind: input, shape index: {}]
  %s7 = inlined_call_operand.vmem [shape: f32[16,1], index: 7, kind: input, shape index: {}]
  %s8 = inlined_call_operand.vmem [shape: f32[16,16], index: 8, kind: input, shape index: {}]
  %s9 = inlined_call_operand.vmem [shape: f32[16,1], index: 9, kind: input, shape index: {}]
  %s10 = inlined_call_operand.vmem [shape: f32[2,16,256], index: 10, kind: output, shape index: {}]
  %s11 = sld [smem:[#allocation0]]
  $region73: #{token_transformer2d_forward.1} parent=0
    _
  %s13 = ssub.s32 1, %s11
  %s14 = scalar_select 0, %s13, %s11
  loop: start=0, step=1, limit=4
  $region2: #{token_transformer2d_forward.1} parent=0 // loop_pre_header
    _
  $region3: #{token_transformer2d_forward.1} parent=0 // loop_header
    %s16 = sphi 0, %s20
    %p17 = scmp.ge.s32.totalorder %s16, 4
    %s26 = sphi 0, %s28
    %s29 = sphi 0, %s26
    %s30 = sphi 0, %s29
    %s46 = sphi 0, %s30
    %s50 = sphi 0, %s50
    %s52 = sphi 0, %s50
    %s53 = sphi 0, %s52
    %s67 = sphi 0, %s53
    %s71 = sphi 0, %s71
    %s73 = sphi 0, %s71
    %s74 = sphi 0, %s73
    %s88 = sphi 0, %s74
    %s92 = sphi 0, %s92
    %s94 = sphi 0, %s92
    %s95 = sphi 0, %s94
    %s109 = sphi 0, %s95
    %s113 = sphi 0, %s113
    %s115 = sphi 0, %s113
    %s116 = sphi 0, %s115
    %s130 = sphi 0, %s116
    %s134 = sphi 0, %s134
    %s136 = sphi 0, %s134
    %s137 = sphi 0, %s136
    %s151 = sphi 0, %s137
    %s155 = sphi 0, %s155
    %s157 = sphi 0, %s155
    %s158 = sphi 0, %s157
    %s172 = sphi 0, %s158
    %s176 = sphi 0, %s176
    %s178 = sphi 0, %s176
    %s179 = sphi 0, %s178
    %s193 = sphi 0, %s179
    %s197 = sphi 0, %s197
    %s199 = sphi 0, %s197
    %s200 = sphi 0, %s199
    %s214 = sphi 0, %s200
    %s218 = sphi 0, %s218
    %s220 = sphi 0, %s218
    %s221 = sphi 0, %s220
    %s235 = sphi 0, %s221
    %s241 = sphi 0, %s243
    %s244 = sphi 0, %s241
    %s245 = sphi 0, %s244
    %s261 = sphi 0, %s245
  $region4: #{token_transformer2d_forward.1} parent=0 // loop_header_branch
    %19 = sbr.rel (%p17) target = $region8
  $region5: #{token_transformer2d_forward.1} parent=0 // loop_body
    %s21 = ssub.s32 %s16, 1
    %s22 = ssub.s32 %s16, 2
    %s23 = sadd.s32 %s16, 1
    %s24 = ssub.s32 %s16, %s23
    %p25 = scmp.eq.s32.totalorder %s24, 0
    %s27 = sadd.s32 %s26, 1
    %s28 = scalar_select %p25, %s26, %s27
    %p31 = pneg %p25
    %p32 = scmp.eq.s32.totalorder %s16, 1
    %p33 = por %p31, %p32
    %p34 = scmp.ne.s32.totalorder %s26, %s29
    %p35 = scmp.eq.s32.totalorder %s16, 0
    %p36 = por %p34, %p35
    %p37 = scmp.ne.s32.totalorder %s26, %s29
    %p38 = scmp.eq.s32.totalorder %s21, 1
    %p39 = por %p37, %p38
    %p40 = scmp.ne.s32.totalorder %s29, %s30
    %p41 = scmp.eq.s32.totalorder %s21, 0
    %p42 = por %p40, %p41
    %p43 = scmp.ne.s32.totalorder %s29, %s30
    %p44 = scmp.eq.s32.totalorder %s22, 1
    %p45 = por %p43, %p44
    %p47 = scmp.ne.s32.totalorder %s30, %s46
    %p48 = scmp.eq.s32.totalorder %s22, 0
    %p49 = por %p47, %p48
    %s51 = sadd.s32 %s50, 1
    %p54 = scmp.eq.s32.totalorder %s16, 1
    %p55 = scmp.ne.s32.totalorder %s50, %s52
    %p56 = scmp.eq.s32.totalorder %s16, 0
    %p57 = por %p55, %p56
    %p58 = scmp.ne.s32.totalorder %s50, %s52
    %p59 = scmp.eq.s32.totalorder %s21, 1
    %p60 = por %p58, %p59
    %p61 = scmp.ne.s32.totalorder %s52, %s53
    %p62 = scmp.eq.s32.totalorder %s21, 0
    %p63 = por %p61, %p62
    %p64 = scmp.ne.s32.totalorder %s52, %s53
    %p65 = scmp.eq.s32.totalorder %s22, 1
    %p66 = por %p64, %p65
    %p68 = scmp.ne.s32.totalorder %s53, %s67
    %p69 = scmp.eq.s32.totalorder %s22, 0
    %p70 = por %p68, %p69
    %s72 = sadd.s32 %s71, 1
    %p75 = scmp.eq.s32.totalorder %s16, 1
    %p76 = scmp.ne.s32.totalorder %s71, %s73
    %p77 = scmp.eq.s32.totalorder %s16, 0
    %p78 = por %p76, %p77
    %p79 = scmp.ne.s32.totalorder %s71, %s73
    %p80 = scmp.eq.s32.totalorder %s21, 1
    %p81 = por %p79, %p80
    %p82 = scmp.ne.s32.totalorder %s73, %s74
    %p83 = scmp.eq.s32.totalorder %s21, 0
    %p84 = por %p82, %p83
    %p85 = scmp.ne.s32.totalorder %s73, %s74
    %p86 = scmp.eq.s32.totalorder %s22, 1
    %p87 = por %p85, %p86
    %p89 = scmp.ne.s32.totalorder %s74, %s88
    %p90 = scmp.eq.s32.totalorder %s22, 0
    %p91 = por %p89, %p90
    %s93 = sadd.s32 %s92, 1
    %p96 = scmp.eq.s32.totalorder %s16, 1
    %p97 = scmp.ne.s32.totalorder %s92, %s94
    %p98 = scmp.eq.s32.totalorder %s16, 0
    %p99 = por %p97, %p98
    %p100 = scmp.ne.s32.totalorder %s92, %s94
    %p101 = scmp.eq.s32.totalorder %s21, 1
    %p102 = por %p100, %p101
    %p103 = scmp.ne.s32.totalorder %s94, %s95
    %p104 = scmp.eq.s32.totalorder %s21, 0
    %p105 = por %p103, %p104
    %p106 = scmp.ne.s32.totalorder %s94, %s95
    %p107 = scmp.eq.s32.totalorder %s22, 1
    %p108 = por %p106, %p107
    %p110 = scmp.ne.s32.totalorder %s95, %s109
    %p111 = scmp.eq.s32.totalorder %s22, 0
    %p112 = por %p110, %p111
    %s114 = sadd.s32 %s113, 1
    %p117 = scmp.eq.s32.totalorder %s16, 1
    %p118 = scmp.ne.s32.totalorder %s113, %s115
    %p119 = scmp.eq.s32.totalorder %s16, 0
    %p120 = por %p118, %p119
    %p121 = scmp.ne.s32.totalorder %s113, %s115
    %p122 = scmp.eq.s32.totalorder %s21, 1
    %p123 = por %p121, %p122
    %p124 = scmp.ne.s32.totalorder %s115, %s116
    %p125 = scmp.eq.s32.totalorder %s21, 0
    %p126 = por %p124, %p125
    %p127 = scmp.ne.s32.totalorder %s115, %s116
    %p128 = scmp.eq.s32.totalorder %s22, 1
    %p129 = por %p127, %p128
    %p131 = scmp.ne.s32.totalorder %s116, %s130
    %p132 = scmp.eq.s32.totalorder %s22, 0
    %p133 = por %p131, %p132
    %s135 = sadd.s32 %s134, 1
    %p138 = scmp.eq.s32.totalorder %s16, 1
    %p139 = scmp.ne.s32.totalorder %s134, %s136
    %p140 = scmp.eq.s32.totalorder %s16, 0
    %p141 = por %p139, %p140
    %p142 = scmp.ne.s32.totalorder %s134, %s136
    %p143 = scmp.eq.s32.totalorder %s21, 1
    %p144 = por %p142, %p143
    %p145 = scmp.ne.s32.totalorder %s136, %s137
    %p146 = scmp.eq.s32.totalorder %s21, 0
    %p147 = por %p145, %p146
    %p148 = scmp.ne.s32.totalorder %s136, %s137
    %p149 = scmp.eq.s32.totalorder %s22, 1
    %p150 = por %p148, %p149
    %p152 = scmp.ne.s32.totalorder %s137, %s151
    %p153 = scmp.eq.s32.totalorder %s22, 0
    %p154 = por %p152, %p153
    %s156 = sadd.s32 %s155, 1
    %p159 = scmp.eq.s32.totalorder %s16, 1
    %p160 = scmp.ne.s32.totalorder %s155, %s157
    %p161 = scmp.eq.s32.totalorder %s16, 0
    %p162 = por %p160, %p161
    %p163 = scmp.ne.s32.totalorder %s155, %s157
    %p164 = scmp.eq.s32.totalorder %s21, 1
    %p165 = por %p163, %p164
    %p166 = scmp.ne.s32.totalorder %s157, %s158
    %p167 = scmp.eq.s32.totalorder %s21, 0
    %p168 = por %p166, %p167
    %p169 = scmp.ne.s32.totalorder %s157, %s158
    %p170 = scmp.eq.s32.totalorder %s22, 1
    %p171 = por %p169, %p170
    %p173 = scmp.ne.s32.totalorder %s158, %s172
    %p174 = scmp.eq.s32.totalorder %s22, 0
    %p175 = por %p173, %p174
    %s177 = sadd.s32 %s176, 1
    %p180 = scmp.eq.s32.totalorder %s16, 1
    %p181 = scmp.ne.s32.totalorder %s176, %s178
    %p182 = scmp.eq.s32.totalorder %s16, 0
    %p183 = por %p181, %p182
    %p184 = scmp.ne.s32.totalorder %s176, %s178
    %p185 = scmp.eq.s32.totalorder %s21, 1
    %p186 = por %p184, %p185
    %p187 = scmp.ne.s32.totalorder %s178, %s179
    %p188 = scmp.eq.s32.totalorder %s21, 0
    %p189 = por %p187, %p188
    %p190 = scmp.ne.s32.totalorder %s178, %s179
    %p191 = scmp.eq.s32.totalorder %s22, 1
    %p192 = por %p190, %p191
    %p194 = scmp.ne.s32.totalorder %s179, %s193
    %p195 = scmp.eq.s32.totalorder %s22, 0
    %p196 = por %p194, %p195
    %s198 = sadd.s32 %s197, 1
    %p201 = scmp.eq.s32.totalorder %s16, 1
    %p202 = scmp.ne.s32.totalorder %s197, %s199
    %p203 = scmp.eq.s32.totalorder %s16, 0
    %p204 = por %p202, %p203
    %p205 = scmp.ne.s32.totalorder %s197, %s199
    %p206 = scmp.eq.s32.totalorder %s21, 1
    %p207 = por %p205, %p206
    %p208 = scmp.ne.s32.totalorder %s199, %s200
    %p209 = scmp.eq.s32.totalorder %s21, 0
    %p210 = por %p208, %p209
    %p211 = scmp.ne.s32.totalorder %s199, %s200
    %p212 = scmp.eq.s32.totalorder %s22, 1
    %p213 = por %p211, %p212
    %p215 = scmp.ne.s32.totalorder %s200, %s214
    %p216 = scmp.eq.s32.totalorder %s22, 0
    %p217 = por %p215, %p216
    %s219 = sadd.s32 %s218, 1
    %p222 = scmp.eq.s32.totalorder %s16, 1
    %p223 = scmp.ne.s32.totalorder %s218, %s220
    %p224 = scmp.eq.s32.totalorder %s16, 0
    %p225 = por %p223, %p224
    %p226 = scmp.ne.s32.totalorder %s218, %s220
    %p227 = scmp.eq.s32.totalorder %s21, 1
    %p228 = por %p226, %p227
    %p229 = scmp.ne.s32.totalorder %s220, %s221
    %p230 = scmp.eq.s32.totalorder %s21, 0
    %p231 = por %p229, %p230
    %p232 = scmp.ne.s32.totalorder %s220, %s221
    %p233 = scmp.eq.s32.totalorder %s22, 1
    %p234 = por %p232, %p233
    %p236 = scmp.ne.s32.totalorder %s221, %s235
    %p237 = scmp.eq.s32.totalorder %s22, 0
    %p238 = por %p236, %p237
    %s239 = ssub.s32 %s16, %s23
    %p240 = scmp.eq.s32.totalorder %s239, 0
    %s242 = sadd.s32 %s241, 1
    %s243 = scalar_select %p240, %s241, %s242
    %p246 = pneg %p240
    %p247 = scmp.eq.s32.totalorder %s16, 1
    %p248 = por %p246, %p247
    %p249 = scmp.ne.s32.totalorder %s241, %s244
    %p250 = scmp.eq.s32.totalorder %s16, 0
    %p251 = por %p249, %p250
    %p252 = scmp.ne.s32.totalorder %s241, %s244
    %p253 = scmp.eq.s32.totalorder %s21, 1
    %p254 = por %p252, %p253
    %p255 = scmp.ne.s32.totalorder %s244, %s245
    %p256 = scmp.eq.s32.totalorder %s21, 0
    %p257 = por %p255, %p256
    %p258 = scmp.ne.s32.totalorder %s244, %s245
    %p259 = scmp.eq.s32.totalorder %s22, 1
    %p260 = por %p258, %p259
    %p262 = scmp.ne.s32.totalorder %s245, %s261
    %p263 = scmp.eq.s32.totalorder %s22, 0
    %p264 = por %p262, %p263
    %p265 = scmp.le.s32.totalorder 1, %s16
    %p266 = scmp.lt.s32.totalorder %s16, 3
    %p267 = pnand %p265, %p266
    %p268 = pneg %p267
    // Predicated region
    $region9: #{token_transformer2d_forward.1} parent=5 // pred_check
      _
    $region10: #{token_transformer2d_forward.1} parent=5 // pred_check_branch
      %270 = sbr.rel (%p267) target = $region12
    $region11: #{token_transformer2d_forward.1} parent=5 // pred_region
      %s271 = ssub.s32 %s16, 1
      // Predicated region
      $region13: #{token_transformer2d_forward.1} parent=11 // pred_check
        %p272 = pneg %p63
      $region14: #{token_transformer2d_forward.1} parent=11 // pred_check_branch
        %274 = sbr.rel (%p272) target = $region16
      $region15: #{token_transformer2d_forward.1} parent=11 // pred_region
        _
      $region16: #{token_transformer2d_forward.1} parent=11 // pred_fallthru
        _
      // Predicated region
      $region17: #{token_transformer2d_forward.1} parent=11 // pred_check
        %p275 = pneg %p84
      $region18: #{token_transformer2d_forward.1} parent=11 // pred_check_branch
        %277 = sbr.rel (%p275) target = $region20
      $region19: #{token_transformer2d_forward.1} parent=11 // pred_region
        _
      $region20: #{token_transformer2d_forward.1} parent=11 // pred_fallthru
        _
      // Predicated region
      $region21: #{token_transformer2d_forward.1} parent=11 // pred_check
        %p278 = pneg %p105
      $region22: #{token_transformer2d_forward.1} parent=11 // pred_check_branch
        %280 = sbr.rel (%p278) target = $region24
      $region23: #{token_transformer2d_forward.1} parent=11 // pred_region
        _
      $region24: #{token_transformer2d_forward.1} parent=11 // pred_fallthru
        _
      // Predicated region
      $region25: #{token_transformer2d_forward.1} parent=11 // pred_check
        %p281 = pneg %p126
      $region26: #{token_transformer2d_forward.1} parent=11 // pred_check_branch
        %283 = sbr.rel (%p281) target = $region28
      $region27: #{token_transformer2d_forward.1} parent=11 // pred_region
        _
      $region28: #{token_transformer2d_forward.1} parent=11 // pred_fallthru
        _
      // Predicated region
      $region29: #{token_transformer2d_forward.1} parent=11 // pred_check
        %p284 = pneg %p147
      $region30: #{token_transformer2d_forward.1} parent=11 // pred_check_branch
        %286 = sbr.rel (%p284) target = $region32
      $region31: #{token_transformer2d_forward.1} parent=11 // pred_region
        _
      $region32: #{token_transformer2d_forward.1} parent=11 // pred_fallthru
        _
      // Predicated region
      $region33: #{token_transformer2d_forward.1} parent=11 // pred_check
        %p287 = pneg %p168
      $region34: #{token_transformer2d_forward.1} parent=11 // pred_check_branch
        %289 = sbr.rel (%p287) target = $region36
      $region35: #{token_transformer2d_forward.1} parent=11 // pred_region
        _
      $region36: #{token_transformer2d_forward.1} parent=11 // pred_fallthru
        _
      // Predicated region
      $region37: #{token_transformer2d_forward.1} parent=11 // pred_check
        %p290 = pneg %p189
      $region38: #{token_transformer2d_forward.1} parent=11 // pred_check_branch
        %292 = sbr.rel (%p290) target = $region40
      $region39: #{token_transformer2d_forward.1} parent=11 // pred_region
        _
      $region40: #{token_transformer2d_forward.1} parent=11 // pred_fallthru
        _
      // Predicated region
      $region41: #{token_transformer2d_forward.1} parent=11 // pred_check
        %p293 = pneg %p210
      $region42: #{token_transformer2d_forward.1} parent=11 // pred_check_branch
        %295 = sbr.rel (%p293) target = $region44
      $region43: #{token_transformer2d_forward.1} parent=11 // pred_region
        _
      $region44: #{token_transformer2d_forward.1} parent=11 // pred_fallthru
        _
      // Predicated region
      $region45: #{token_transformer2d_forward.1} parent=11 // pred_check
        %p296 = pneg %p231
      $region46: #{token_transformer2d_forward.1} parent=11 // pred_check_branch
        %298 = sbr.rel (%p296) target = $region48
      $region47: #{token_transformer2d_forward.1} parent=11 // pred_region
        _
      $region48: #{token_transformer2d_forward.1} parent=11 // pred_fallthru
        _
    $region12: #{token_transformer2d_forward.1} parent=5 // pred_fallthru
      _
    %p299 = scmp.lt.s32.totalorder %s16, 2
    // Predicated region
    $region49: #{token_transformer2d_forward.1} parent=5 // pred_check
      %p300 = pneg %p299
    $region50: #{token_transformer2d_forward.1} parent=5 // pred_check_branch
      %302 = sbr.rel (%p300) target = $region52
    $region51: #{token_transformer2d_forward.1} parent=5 // pred_region
      // Predicated region
      $region53: #{token_transformer2d_forward.1} parent=51 // pred_check
        %p303 = pneg %p36
      $region54: #{token_transformer2d_forward.1} parent=51 // pred_check_branch
        %305 = sbr.rel (%p303) target = $region56
      $region55: #{token_transformer2d_forward.1} parent=51 // pred_region
        %p306 = scmp.lt.s32.totalorder %s16, 1
        %s307 = scalar_select %p306, %s16, 1
        %s308 = smul.addr %s307, 2
        %s309 = smul.addr %s308, 8
        %s310 = scalar_lea.vmem %s0, %s309
      $region56: #{token_transformer2d_forward.1} parent=51 // pred_fallthru
        _
    $region52: #{token_transformer2d_forward.1} parent=5 // pred_fallthru
      _
    %p311 = scmp.le.s32.totalorder 1, %s16
    %p312 = scmp.lt.s32.totalorder %s16, 3
    %p313 = pnand %p311, %p312
    %p314 = pneg %p313
    // Predicated region
    $region57: #{token_transformer2d_forward.1} parent=5 // pred_check
      _
    $region58: #{token_transformer2d_forward.1} parent=5 // pred_check_branch
      %316 = sbr.rel (%p313) target = $region60
    $region59: #{token_transformer2d_forward.1} parent=5 // pred_region
      %s317 = ssub.s32 %s16, 1
      %p318 = scmp.lt.s32.totalorder %s21, 1
      %s319 = scalar_select %p318, %s21, 1
      %s320 = smul.addr %s319, 2
      %s321 = smul.addr %s320, 8
      %s322 = scalar_lea.vmem %s0, %s321
      %p323 = pneg %p42
      %p324 = pneg %p39
      %p325 = pneg %p63
      %p326 = pneg %p60
      %p327 = pneg %p84
      %p328 = pneg %p81
      %p329 = pneg %p105
      %p330 = pneg %p102
      %p331 = pneg %p126
      %p332 = pneg %p123
      %p333 = pneg %p147
      %p334 = pneg %p144
      %p335 = pneg %p168
      %p336 = pneg %p165
      %p337 = pneg %p189
      %p338 = pneg %p186
      %p339 = pneg %p210
      %p340 = pneg %p207
      %p341 = pneg %p231
      %p342 = pneg %p228
      %p343 = pneg %p257
      %p344 = pneg %p254
      %p345 = scmp.lt.s32.totalorder %s21, 1
      %s346 = scalar_select %p345, %s21, 1
      %s347 = smul.addr %s346, 4
      %s348 = smul.addr %s347, 8
      %s349 = scalar_lea.vmem %s10, %s348
      %p350 = scmp.lt.s32.totalorder %s21, 1
      %s351 = scalar_select %p350, %s21, 1
      %s352 = smul.addr %s351, 2
      %s353 = smul.addr %s352, 8
      %s354 = scalar_lea.vmem %s0, %s353
      %p355 = scmp.lt.s32.totalorder %s21, 1
      %s356 = scalar_select %p355, %s21, 1
      %s357 = smul.addr %s356, 4
      %s358 = smul.addr %s357, 8
      %s359 = scalar_lea.vmem %s10, %s358
      %v362 = vld [vmem:[%s354] sm:$0xff]
      %v363 = vld [vmem:[%s354 + $0x8] sm:$0xff]
      %v364 = vld [vmem:[%s1] sm:$0xff]
      %v365 = vld [vmem:[%s1 + $0x8] sm:$0xff]
      %v366 = vadd.f32 %v362, %v364
      %v367 = vadd.f32 %v363, %v365
      %v368 = vrot.slane %v366, 4
      %v369 = vadd.f32 %v366, %v368
      %v370 = vrot.slane %v369, 2
      %v371 = vadd.f32 %v369, %v370
      %v372 = vrot.slane %v371, 1
      %v373 = vadd.f32 %v371, %v372
      %v374 = vrot.slane %v367, 4
      %v375 = vadd.f32 %v367, %v374
      %v376 = vrot.slane %v375, 2
      %v377 = vadd.f32 %v375, %v376
      %v378 = vrot.slane %v377, 1
      %v379 = vadd.f32 %v377, %v378
      %v380 = vrcp.pop 8.0
      %v381 = vmul.f32 %v373, %v380
      %v382 = vmul.f32 %v379, %v380
      %v383 = vsub.f32 %v366, %v381
      %v384 = vsub.f32 %v367, %v382
      %v385 = vmul.f32 %v383, %v383
      %v386 = vmul.f32 %v384, %v384
      %v387 = vrot.slane %v385, 4
      %v388 = vadd.f32 %v385, %v387
      %v389 = vrot.slane %v388, 2
      %v390 = vadd.f32 %v388, %v389
      %v391 = vrot.slane %v390, 1
      %v392 = vadd.f32 %v390, %v391
      %v393 = vrot.slane %v386, 4
      %v394 = vadd.f32 %v386, %v393
      %v395 = vrot.slane %v394, 2
      %v396 = vadd.f32 %v394, %v395
      %v397 = vrot.slane %v396, 1
      %v398 = vadd.f32 %v396, %v397
      %v399 = vmul.f32 %v392, %v380
      %v400 = vmul.f32 %v398, %v380
      %v401 = vadd.f32 %v399, 1e-05
      %v402 = vadd.f32 %v400, 1e-05
      %v403 = vrsqrt.pop %v401
      %v404 = vrsqrt.pop %v402
      %v405 = vmul.f32 %v383, %v403
      %v406 = vmul.f32 %v384, %v404
      %v407 = vld [vmem:[%s2] sm:$0xff]
      %v408 = vld [vmem:[%s2 + $0x8] sm:$0xff]
      %v409 = vld [vmem:[%s2 + $0x10] sm:$0xff]
      %v410 = vld [vmem:[%s2 + $0x18] sm:$0xff]
      %v411 = vld [vmem:[%s2 + $0x20] sm:$0xff]
      %v412 = vld [vmem:[%s2 + $0x28] sm:$0xff]
      %v413 = vld [vmem:[%s3] sm:$0xff]
      %v414 = vld [vmem:[%s3 + $0x8] sm:$0xff]
      %v415 = vld [vmem:[%s3 + $0x10] sm:$0xff]
      %v416 = vld [vmem:[%s3 + $0x18] sm:$0xff]
      %v417 = vld [vmem:[%s3 + $0x20] sm:$0xff]
      %v418 = vld [vmem:[%s3 + $0x28] sm:$0xff]
      %420 = vset.pattern.permute.xlu0 0
      %421 = vperm.xlu0 %420, %v413
      %v422 = vpop.permute.xlu0 %421
      %425 = vset.pattern.permute.xlu0 0
      %426 = vperm.xlu0 %425, %v414
      %v427 = vpop.permute.xlu0 %426
      %430 = vset.pattern.permute.xlu0 0
      %431 = vperm.xlu0 %430, %v415
      %v432 = vpop.permute.xlu0 %431
      %435 = vset.pattern.permute.xlu0 0
      %436 = vperm.xlu0 %435, %v416
      %v437 = vpop.permute.xlu0 %436
      %440 = vset.pattern.permute.xlu0 0
      %441 = vperm.xlu0 %440, %v417
      %v442 = vpop.permute.xlu0 %441
      %445 = vset.pattern.permute.xlu0 0
      %446 = vperm.xlu0 %445, %v418
      %v447 = vpop.permute.xlu0 %446
      %vm449 = vcmask 64512
      %v451 = vsel %vm449, %v407, 0
      %v454 = vsel %vm449, %v408, 0
      %v457 = vsel %vm449, %v409, 0
      %v460 = vsel %vm449, %v410, 0
      %v463 = vsel %vm449, %v411, 0
      %v466 = vsel %vm449, %v412, 0
      %468 = vmatprep.subr.mxu0 %v406
      %469 = vmatpush1.msra.mxu0 %v405
      %470 = vmatprep.subr.mxu0 0.0
      %471 = vmatpush1.msra.mxu0 0.0
      %472 = vmatprep.subr.mxu0 0.0
      %473 = vmatpush1.msra.mxu0 0.0
      %474 = vmatprep.subr.mxu0 0.0
      %475 = vmatpush1.msra.mxu0 0.0
      %476 = vmatprep.subr.mxu0 0.0
      %477 = vmatpush1.msra.mxu0 0.0
      %478 = vmatprep.subr.mxu0 0.0
      %479 = vmatpush1.msra.mxu0 0.0
      %480 = vmatprep.subr.mxu0 0.0
      %481 = vmatpush1.msra.mxu0 0.0
      %482 = vmatprep.subr.mxu0 0.0
      %483 = vmatpush1.msra.mxu0 0.0
      %484 = vmatprep.subr.mxu0 0.0
      %485 = vmatpush1.msra.mxu0 0.0
      %486 = vmatprep.subr.mxu0 0.0
      %487 = vmatpush1.msra.mxu0 0.0
      %488 = vmatprep.subr.mxu0 0.0
      %489 = vmatpush1.msra.mxu0 0.0
      %490 = vmatprep.subr.mxu0 0.0
      %491 = vmatpush1.msra.mxu0 0.0
      %492 = vmatprep.subr.mxu0 0.0
      %493 = vmatpush1.msra.mxu0 0.0
      %494 = vmatprep.subr.mxu0 0.0
      %495 = vmatpush1.msra.mxu0 0.0
      %496 = vmatprep.subr.mxu0 0.0
      %497 = vmatpush1.msra.mxu0 0.0
      %498 = vmatprep.subr.mxu0 0.0
      %499 = vmatpush1.msra.mxu0 0.0
      %500 = vmatprep.subr.mxu0 0.0
      %501 = vmatpush1.msra.mxu0 0.0
      %502 = vmatprep.subr.mxu0 0.0
      %503 = vmatpush1.msra.mxu0 0.0
      %504 = vmatprep.subr.mxu0 0.0
      %505 = vmatpush1.msra.mxu0 0.0
      %506 = vmatprep.subr.mxu0 0.0
      %507 = vmatpush1.msra.mxu0 0.0
      %508 = vmatprep.subr.mxu0 0.0
      %509 = vmatpush1.msra.mxu0 0.0
      %510 = vmatprep.subr.mxu0 0.0
      %511 = vmatpush1.msra.mxu0 0.0
      %512 = vmatprep.subr.mxu0 0.0
      %513 = vmatpush1.msra.mxu0 0.0
      %514 = vmatprep.subr.mxu0 0.0
      %515 = vmatpush1.msra.mxu0 0.0
      %516 = vmatprep.subr.mxu0 0.0
      %517 = vmatpush1.msra.mxu0 0.0
      %518 = vmatprep.subr.mxu0 0.0
      %519 = vmatpush1.msra.mxu0 0.0
      %520 = vmatprep.subr.mxu0 0.0
      %521 = vmatpush1.msra.mxu0 0.0
      %522 = vmatprep.subr.mxu0 0.0
      %523 = vmatpush1.msra.mxu0 0.0
      %524 = vmatprep.subr.mxu0 0.0
      %525 = vmatpush1.msra.mxu0 0.0
      %526 = vmatprep.subr.mxu0 0.0
      %527 = vmatpush1.msra.mxu0 0.0
      %528 = vmatprep.subr.mxu0 0.0
      %529 = vmatpush1.msra.mxu0 0.0
      %530 = vmatprep.subr.mxu0 0.0
      %531 = vmatpush1.msra.mxu0 0.0
      %532 = vmatprep.mubr.f32.mxu0 0.0
      %533 = vmatmul.mubr.f32.gmra.mrb[0].mxu0 %v451
      %v534 = vpop.f32.mrb[0].mxu0
      %v535 = vadd.f32 %v422, %v534
      %v536 = vpop.f32.mrb[0].mxu0
      %v537 = vadd.f32 %v422, %v536
      %538 = vmatprep.mubr.f32.mxu0 0.0
      %539 = vmatmul.mubr.f32.gmra.mrb[0].mxu0 %v454
      %v540 = vpop.f32.mrb[0].mxu0
      %v541 = vadd.f32 %v427, %v540
      %v542 = vpop.f32.mrb[0].mxu0
      %v543 = vadd.f32 %v427, %v542
      %544 = vmatprep.mubr.f32.mxu0 0.0
      %545 = vmatmul.mubr.f32.gmra.mrb[0].mxu0 %v457
      %v546 = vpop.f32.mrb[0].mxu0
      %v547 = vadd.f32 %v432, %v546
      %v548 = vpop.f32.mrb[0].mxu0
      %v549 = vadd.f32 %v432, %v548
      %550 = vmatprep.mubr.f32.mxu0 0.0
      %551 = vmatmul.mubr.f32.gmra.mrb[0].mxu0 %v460
      %v552 = vpop.f32.mrb[0].mxu0
      %v553 = vadd.f32 %v437, %v552
      %v554 = vpop.f32.mrb[0].mxu0
      %v555 = vadd.f32 %v437, %v554
      %556 = vmatprep.mubr.f32.mxu0 0.0
      %557 = vmatmul.mubr.f32.gmra.mrb[0].mxu0 %v463
      %v558 = vpop.f32.mrb[0].mxu0
      %v559 = vadd.f32 %v442, %v558
      %v560 = vpop.f32.mrb[0].mxu0
      %v561 = vadd.f32 %v442, %v560
      %562 = vmatprep.mubr.f32.mxu0 0.0
      %563 = vmatmul.mubr.f32.gmra.mrb[0].mxu0 %v466
      %v564 = vpop.f32.mrb[0].mxu0
      %v565 = vadd.f32 %v447, %v564
      %v566 = vpop.f32.mrb[0].mxu0
      %v567 = vadd.f32 %v447, %v566
      %568 = vdwg.mxu0
      %569 = vxpose.xlu0.b32.start [1/16] %v535, 128
      %570 = vxpose.xlu0.b32.cont [2/16] %v541, 128
      %571 = vxpose.xlu0.b32.cont [3/16] 0.0, 128
      %572 = vxpose.xlu0.b32.cont [4/16] 0.0, 128
      %573 = vxpose.xlu0.b32.cont [5/16] 0.0, 128
      %574 = vxpose.xlu0.b32.cont [6/16] 0.0, 128
      %575 = vxpose.xlu0.b32.cont [7/16] 0.0, 128
      %576 = vxpose.xlu0.b32.cont [8/16] 0.0, 128
      %577 = vxpose.xlu0.b32.cont [9/16] 0.0, 128
      %578 = vxpose.xlu0.b32.cont [10/16] 0.0, 128
      %579 = vxpose.xlu0.b32.cont [11/16] 0.0, 128
      %580 = vxpose.xlu0.b32.cont [12/16] 0.0, 128
      %581 = vxpose.xlu0.b32.cont [13/16] 0.0, 128
      %582 = vxpose.xlu0.b32.cont [14/16] 0.0, 128
      %583 = vxpose.xlu0.b32.cont [15/16] 0.0, 128
      %584 = vxpose.xlu0.b32.end [16/16] 0.0, 128
      %v585 = vpop.trf.xlu0
      %v586 = vpop.trf.xlu0
      %v587 = vpop.trf.xlu0
      %v588 = vpop.trf.xlu0
      %v589 = vpop.trf.xlu0
      %v590 = vpop.trf.xlu0
      %v591 = vpop.trf.xlu0
      %v592 = vpop.trf.xlu0
      %v593 = vpop.trf.xlu0
      %v594 = vpop.trf.xlu0
      %v595 = vpop.trf.xlu0
      %v596 = vpop.trf.xlu0
      %v597 = vpop.trf.xlu0
      %v598 = vpop.trf.xlu0
      %v599 = vpop.trf.xlu0
      %v600 = vpop.trf.xlu0
      %601 = vxpose.xlu0.b32.start [1/16] %v537, 128
      %602 = vxpose.xlu0.b32.cont [2/16] %v543, 128
      %603 = vxpose.xlu0.b32.cont [3/16] 0.0, 128
      %604 = vxpose.xlu0.b32.cont [4/16] 0.0, 128
      %605 = vxpose.xlu0.b32.cont [5/16] 0.0, 128
      %606 = vxpose.xlu0.b32.cont [6/16] 0.0, 128
      %607 = vxpose.xlu0.b32.cont [7/16] 0.0, 128
      %608 = vxpose.xlu0.b32.cont [8/16] 0.0, 128
      %609 = vxpose.xlu0.b32.cont [9/16] 0.0, 128
      %610 = vxpose.xlu0.b32.cont [10/16] 0.0, 128
      %611 = vxpose.xlu0.b32.cont [11/16] 0.0, 128
      %612 = vxpose.xlu0.b32.cont [12/16] 0.0, 128
      %613 = vxpose.xlu0.b32.cont [13/16] 0.0, 128
      %614 = vxpose.xlu0.b32.cont [14/16] 0.0, 128
      %615 = vxpose.xlu0.b32.cont [15/16] 0.0, 128
      %616 = vxpose.xlu0.b32.end [16/16] 0.0, 128
      %v617 = vpop.trf.xlu0
      %v618 = vpop.trf.xlu0
      %v619 = vpop.trf.xlu0
      %v620 = vpop.trf.xlu0
      %v621 = vpop.trf.xlu0
      %v622 = vpop.trf.xlu0
      %v623 = vpop.trf.xlu0
      %v624 = vpop.trf.xlu0
      %v625 = vpop.trf.xlu0
      %v626 = vpop.trf.xlu0
      %v627 = vpop.trf.xlu0
      %v628 = vpop.trf.xlu0
      %v629 = vpop.trf.xlu0
      %v630 = vpop.trf.xlu0
      %v631 = vpop.trf.xlu0
      %v632 = vpop.trf.xlu0
      %v633 = vpack.c.bf16 %v547, %v547
      %v634 = vpack.c.bf16 %v549, %v549
      %v635 = vpack.c.bf16 %v559, %v559
      %v636 = vpack.c.bf16 %v561, %v561
      %v637 = vpack.c.bf16 %v586, %v585
      %v638 = vpack.c.bf16 %v588, %v587
      %v639 = vpack.c.bf16 %v590, %v589
      %v640 = vpack.c.bf16 %v592, %v591
      %v641 = vpack.c.bf16 %v594, %v593
      %v642 = vpack.c.bf16 %v596, %v595
      %v643 = vpack.c.bf16 %v598, %v597
      %v644 = vpack.c.bf16 %v600, %v599
      %v646 = vsel %vm449, %v637, 0
      %v649 = vsel %vm449, %v638, 0
      %v652 = vsel %vm449, %v639, 0
      %v655 = vsel %vm449, %v640, 0
      %v658 = vsel %vm449, %v641, 0
      %v661 = vsel %vm449, %v642, 0
      %v664 = vsel %vm449, %v643, 0
      %v667 = vsel %vm449, %v644, 0
      %vm669 = vcmask 1043456
      %v671 = vsel %vm669, %v633, 0
      %v674 = vsel %vm669, %v634, 0
      %676 = vmatprep.subr.bf16.mxu0 %v674
      %677 = vmatpush1.bf16.msra.mxu0 %v671
      %678 = vmatprep.subr.bf16.mxu0 0
      %679 = vmatpush1.bf16.msra.mxu0 0
      %680 = vmatprep.subr.bf16.mxu0 0
      %681 = vmatpush1.bf16.msra.mxu0 0
      %682 = vmatprep.subr.bf16.mxu0 0
      %683 = vmatpush1.bf16.msra.mxu0 0
      %684 = vmatprep.subr.bf16.mxu0 0
      %685 = vmatpush1.bf16.msra.mxu0 0
      %686 = vmatprep.subr.bf16.mxu0 0
      %687 = vmatpush1.bf16.msra.mxu0 0
      %688 = vmatprep.subr.bf16.mxu0 0
      %689 = vmatpush1.bf16.msra.mxu0 0
      %690 = vmatprep.subr.bf16.mxu0 0
      %691 = vmatpush1.bf16.msra.mxu0 0
      %692 = vmatprep.subr.bf16.mxu0 0
      %693 = vmatpush1.bf16.msra.mxu0 0
      %694 = vmatprep.subr.bf16.mxu0 0
      %695 = vmatpush1.bf16.msra.mxu0 0
      %696 = vmatprep.subr.bf16.mxu0 0
      %697 = vmatpush1.bf16.msra.mxu0 0
      %698 = vmatprep.subr.bf16.mxu0 0
      %699 = vmatpush1.bf16.msra.mxu0 0
      %700 = vmatprep.subr.bf16.mxu0 0
      %701 = vmatpush1.bf16.msra.mxu0 0
      %702 = vmatprep.subr.bf16.mxu0 0
      %703 = vmatpush1.bf16.msra.mxu0 0
      %704 = vmatprep.subr.bf16.mxu0 0
      %705 = vmatpush1.bf16.msra.mxu0 0
      %706 = vmatprep.subr.bf16.mxu0 0
      %707 = vmatpush1.bf16.msra.mxu0 0
      %708 = vmatprep.mubr.bf16.mxu0 0
      %709 = vmatmul.mubr.bf16.gmra.mrb[0].mxu0 %v646
      %v710 = vpop.f32.mrb[0].mxu0
      %v711 = vadd.f32 0.0, %v710
      %v712 = vpop.f32.mrb[0].mxu0
      %v713 = vadd.f32 0.0, %v712
      %v714 = vpop.f32.mrb[0].mxu0
      %v715 = vadd.f32 0.0, %v714
      %v716 = vpop.f32.mrb[0].mxu0
      %v717 = vadd.f32 0.0, %v716
      %718 = vmatprep.mubr.bf16.mxu0 0
      %719 = vmatmul.mubr.bf16.gmra.mrb[0].mxu0 %v649
      %v720 = vpop.f32.mrb[0].mxu0
      %v721 = vadd.f32 0.0, %v720
      %v722 = vpop.f32.mrb[0].mxu0
      %v723 = vadd.f32 0.0, %v722
      %v724 = vpop.f32.mrb[0].mxu0
      %v725 = vadd.f32 0.0, %v724
      %v726 = vpop.f32.mrb[0].mxu0
      %v727 = vadd.f32 0.0, %v726
      %728 = vmatprep.mubr.bf16.mxu0 0
      %729 = vmatmul.mubr.bf16.gmra.mrb[0].mxu0 %v652
      %v730 = vpop.f32.mrb[0].mxu0
      %v731 = vadd.f32 0.0, %v730
      %v732 = vpop.f32.mrb[0].mxu0
      %v733 = vadd.f32 0.0, %v732
      %v734 = vpop.f32.mrb[0].mxu0
      %v735 = vadd.f32 0.0, %v734
      %v736 = vpop.f32.mrb[0].mxu0
      %v737 = vadd.f32 0.0, %v736
      %738 = vmatprep.mubr.bf16.mxu0 0
      %739 = vmatmul.mubr.bf16.gmra.mrb[0].mxu0 %v655
      %v740 = vpop.f32.mrb[0].mxu0
      %v741 = vadd.f32 0.0, %v740
      %v742 = vpop.f32.mrb[0].mxu0
      %v743 = vadd.f32 0.0, %v742
      %v744 = vpop.f32.mrb[0].mxu0
      %v745 = vadd.f32 0.0, %v744
      %v746 = vpop.f32.mrb[0].mxu0
      %v747 = vadd.f32 0.0, %v746
      %748 = vmatprep.mubr.bf16.mxu0 0
      %749 = vmatmul.mubr.bf16.gmra.mrb[0].mxu0 %v658
      %v750 = vpop.f32.mrb[0].mxu0
      %v751 = vadd.f32 0.0, %v750
      %v752 = vpop.f32.mrb[0].mxu0
      %v753 = vadd.f32 0.0, %v752
      %v754 = vpop.f32.mrb[0].mxu0
      %v755 = vadd.f32 0.0, %v754
      %v756 = vpop.f32.mrb[0].mxu0
      %v757 = vadd.f32 0.0, %v756
      %758 = vmatprep.mubr.bf16.mxu0 0
      %759 = vmatmul.mubr.bf16.gmra.mrb[0].mxu0 %v661
      %v760 = vpop.f32.mrb[0].mxu0
      %v761 = vadd.f32 0.0, %v760
      %v762 = vpop.f32.mrb[0].mxu0
      %v763 = vadd.f32 0.0, %v762
      %v764 = vpop.f32.mrb[0].mxu0
      %v765 = vadd.f32 0.0, %v764
      %v766 = vpop.f32.mrb[0].mxu0
      %v767 = vadd.f32 0.0, %v766
      %768 = vmatprep.mubr.bf16.mxu0 0
      %769 = vmatmul.mubr.bf16.gmra.mrb[0].mxu0 %v664
      %v770 = vpop.f32.mrb[0].mxu0
      %v771 = vadd.f32 0.0, %v770
      %v772 = vpop.f32.mrb[0].mxu0
      %v773 = vadd.f32 0.0, %v772
      %v774 = vpop.f32.mrb[0].mxu0
      %v775 = vadd.f32 0.0, %v774
      %v776 = vpop.f32.mrb[0].mxu0
      %v777 = vadd.f32 0.0, %v776
      %778 = vmatprep.mubr.bf16.mxu0 0
      %779 = vmatmul.mubr.bf16.gmra.mrb[0].mxu0 %v667
      %v780 = vpop.f32.mrb[0].mxu0
      %v781 = vadd.f32 0.0, %v780
      %v782 = vpop.f32.mrb[0].mxu0
      %v783 = vadd.f32 0.0, %v782
      %v784 = vpop.f32.mrb[0].mxu0
      %v785 = vadd.f32 0.0, %v784
      %v786 = vpop.f32.mrb[0].mxu0
      %v787 = vadd.f32 0.0, %v786
      %788 = vdwg.mxu0
      %v789 = vmax.f32 %v711, %v713
      %790 = vmax.xlane.f32.xlu0 %v789
      %v791 = vpop.xlane.xlu0 %790
      %v792 = vmax.f32 %v715, %v717
      %793 = vmax.xlane.f32.xlu0 %v792
      %v794 = vpop.xlane.xlu0 %793
      %v795 = vmax.f32 %v721, %v723
      %796 = vmax.xlane.f32.xlu0 %v795
      %v797 = vpop.xlane.xlu0 %796
      %v798 = vmax.f32 %v725, %v727
      %799 = vmax.xlane.f32.xlu0 %v798
      %v800 = vpop.xlane.xlu0 %799
      %v801 = vmax.f32 %v731, %v733
      %802 = vmax.xlane.f32.xlu0 %v801
      %v803 = vpop.xlane.xlu0 %802
      %v804 = vmax.f32 %v735, %v737
      %805 = vmax.xlane.f32.xlu0 %v804
      %v806 = vpop.xlane.xlu0 %805
      %v807 = vmax.f32 %v741, %v743
      %808 = vmax.xlane.f32.xlu0 %v807
      %v809 = vpop.xlane.xlu0 %808
      %v810 = vmax.f32 %v745, %v747
      %811 = vmax.xlane.f32.xlu0 %v810
      %v812 = vpop.xlane.xlu0 %811
      %v813 = vmax.f32 %v751, %v753
      %814 = vmax.xlane.f32.xlu0 %v813
      %v815 = vpop.xlane.xlu0 %814
      %v816 = vmax.f32 %v755, %v757
      %817 = vmax.xlane.f32.xlu0 %v816
      %v818 = vpop.xlane.xlu0 %817
      %v819 = vmax.f32 %v761, %v763
      %820 = vmax.xlane.f32.xlu0 %v819
      %v821 = vpop.xlane.xlu0 %820
      %v822 = vmax.f32 %v765, %v767
      %823 = vmax.xlane.f32.xlu0 %v822
      %v824 = vpop.xlane.xlu0 %823
      %v825 = vmax.f32 %v771, %v773
      %826 = vmax.xlane.f32.xlu0 %v825
      %v827 = vpop.xlane.xlu0 %826
      %v828 = vmax.f32 %v775, %v777
      %829 = vmax.xlane.f32.xlu0 %v828
      %v830 = vpop.xlane.xlu0 %829
      %v831 = vmax.f32 %v781, %v783
      %832 = vmax.xlane.f32.xlu0 %v831
      %v833 = vpop.xlane.xlu0 %832
      %v834 = vmax.f32 %v785, %v787
      %835 = vmax.xlane.f32.xlu0 %v834
      %v836 = vpop.xlane.xlu0 %835
      %v837 = vsub.f32 %v711, %v791
      %v838 = vsub.f32 %v713, %v791
      %v839 = vsub.f32 %v715, %v794
      %v840 = vsub.f32 %v717, %v794
      %v841 = vsub.f32 %v721, %v797
      %v842 = vsub.f32 %v723, %v797
      %v843 = vsub.f32 %v725, %v800
      %v844 = vsub.f32 %v727, %v800
      %v845 = vsub.f32 %v731, %v803
      %v846 = vsub.f32 %v733, %v803
      %v847 = vsub.f32 %v735, %v806
      %v848 = vsub.f32 %v737, %v806
      %v849 = vsub.f32 %v741, %v809
      %v850 = vsub.f32 %v743, %v809
      %v851 = vsub.f32 %v745, %v812
      %v852 = vsub.f32 %v747, %v812
      %v853 = vsub.f32 %v751, %v815
      %v854 = vsub.f32 %v753, %v815
      %v855 = vsub.f32 %v755, %v818
      %v856 = vsub.f32 %v757, %v818
      %v857 = vsub.f32 %v761, %v821
      %v858 = vsub.f32 %v763, %v821
      %v859 = vsub.f32 %v765, %v824
      %v860 = vsub.f32 %v767, %v824
      %v861 = vsub.f32 %v771, %v827
      %v862 = vsub.f32 %v773, %v827
      %v863 = vsub.f32 %v775, %v830
      %v864 = vsub.f32 %v777, %v830
      %v865 = vsub.f32 %v781, %v833
      %v866 = vsub.f32 %v783, %v833
      %v867 = vsub.f32 %v785, %v836
      %v868 = vsub.f32 %v787, %v836
      %v869 = vmul.f32 %v837, 1.442695
      %v870 = vpow.pop %v869
      %v871 = vmul.f32 %v838, 1.442695
      %v872 = vpow.pop %v871
      %v873 = vmul.f32 %v839, 1.442695
      %v874 = vpow.pop %v873
      %v875 = vmul.f32 %v840, 1.442695
      %v876 = vpow.pop %v875
      %v877 = vmul.f32 %v841, 1.442695
      %v878 = vpow.pop %v877
      %v879 = vmul.f32 %v842, 1.442695
      %v880 = vpow.pop %v879
      %v881 = vmul.f32 %v843, 1.442695
      %v882 = vpow.pop %v881
      %v883 = vmul.f32 %v844, 1.442695
      %v884 = vpow.pop %v883
      %v885 = vmul.f32 %v845, 1.442695
      %v886 = vpow.pop %v885
      %v887 = vmul.f32 %v846, 1.442695
      %v888 = vpow.pop %v887
      %v889 = vmul.f32 %v847, 1.442695
      %v890 = vpow.pop %v889
      %v891 = vmul.f32 %v848, 1.442695
      %v892 = vpow.pop %v891
      %v893 = vmul.f32 %v849, 1.442695
      %v894 = vpow.pop %v893
      %v895 = vmul.f32 %v850, 1.442695
      %v896 = vpow.pop %v895
      %v897 = vmul.f32 %v851, 1.442695
      %v898 = vpow.pop %v897
      %v899 = vmul.f32 %v852, 1.442695
      %v900 = vpow.pop %v899
      %v901 = vmul.f32 %v853, 1.442695
      %v902 = vpow.pop %v901
      %v903 = vmul.f32 %v854, 1.442695
      %v904 = vpow.pop %v903
      %v905 = vmul.f32 %v855, 1.442695
      %v906 = vpow.pop %v905
      %v907 = vmul.f32 %v856, 1.442695
      %v908 = vpow.pop %v907
      %v909 = vmul.f32 %v857, 1.442695
      %v910 = vpow.pop %v909
      %v911 = vmul.f32 %v858, 1.442695
      %v912 = vpow.pop %v911
      %v913 = vmul.f32 %v859, 1.442695
      %v914 = vpow.pop %v913
      %v915 = vmul.f32 %v860, 1.442695
      %v916 = vpow.pop %v915
      %v917 = vmul.f32 %v861, 1.442695
      %v918 = vpow.pop %v917
      %v919 = vmul.f32 %v862, 1.442695
      %v920 = vpow.pop %v919
      %v921 = vmul.f32 %v863, 1.442695
      %v922 = vpow.pop %v921
      %v923 = vmul.f32 %v864, 1.442695
      %v924 = vpow.pop %v923
      %v925 = vmul.f32 %v865, 1.442695
      %v926 = vpow.pop %v925
      %v927 = vmul.f32 %v866, 1.442695
      %v928 = vpow.pop %v927
      %v929 = vmul.f32 %v867, 1.442695
      %v930 = vpow.pop %v929
      %v931 = vmul.f32 %v868, 1.442695
      %v932 = vpow.pop %v931
      %v933 = vpack.c.bf16 %v874, %v870
      %v934 = vpack.c.bf16 %v876, %v872
      %v935 = vpack.c.bf16 %v882, %v878
      %v936 = vpack.c.bf16 %v884, %v880
      %v937 = vpack.c.bf16 %v890, %v886
      %v938 = vpack.c.bf16 %v892, %v888
      %v939 = vpack.c.bf16 %v898, %v894
      %v940 = vpack.c.bf16 %v900, %v896
      %v941 = vpack.c.bf16 %v906, %v902
      %v942 = vpack.c.bf16 %v908, %v904
      %v943 = vpack.c.bf16 %v914, %v910
      %v944 = vpack.c.bf16 %v916, %v912
      %v945 = vpack.c.bf16 %v922, %v918
      %v946 = vpack.c.bf16 %v924, %v920
      %v947 = vpack.c.bf16 %v930, %v926
      %v948 = vpack.c.bf16 %v932, %v928
      %949 = vmatprep.subr.bf16.mxu0 %v934
      %950 = vmatpush1.bf16.xpose.msra.mxu0 %v933
      %951 = vmatprep.subr.bf16.mxu0 %v936
      %952 = vmatpush1.bf16.xpose.msra.mxu0 %v935
      %953 = vmatprep.subr.bf16.mxu0 %v938
      %954 = vmatpush1.bf16.xpose.msra.mxu0 %v937
      %955 = vmatprep.subr.bf16.mxu0 %v940
      %956 = vmatpush1.bf16.xpose.msra.mxu0 %v939
      %957 = vmatprep.subr.bf16.mxu0 %v942
      %958 = vmatpush1.bf16.xpose.msra.mxu0 %v941
      %959 = vmatprep.subr.bf16.mxu0 %v944
      %960 = vmatpush1.bf16.xpose.msra.mxu0 %v943
      %961 = vmatprep.subr.bf16.mxu0 %v946
      %962 = vmatpush1.bf16.xpose.msra.mxu0 %v945
      %963 = vmatprep.subr.bf16.mxu0 %v948
      %964 = vmatpush1.bf16.xpose.msra.mxu0 %v947
      %965 = vmatprep.subr.bf16.mxu0 0
      %966 = vmatpush1.bf16.xpose.msra.mxu0 0
      %967 = vmatprep.subr.bf16.mxu0 0
      %968 = vmatpush1.bf16.xpose.msra.mxu0 0
      %969 = vmatprep.subr.bf16.mxu0 0
      %970 = vmatpush1.bf16.xpose.msra.mxu0 0
      %971 = vmatprep.subr.bf16.mxu0 0
      %972 = vmatpush1.bf16.xpose.msra.mxu0 0
      %973 = vmatprep.subr.bf16.mxu0 0
      %974 = vmatpush1.bf16.xpose.msra.mxu0 0
      %975 = vmatprep.subr.bf16.mxu0 0
      %976 = vmatpush1.bf16.xpose.msra.mxu0 0
      %977 = vmatprep.subr.bf16.mxu0 0
      %978 = vmatpush1.bf16.xpose.msra.mxu0 0
      %979 = vmatprep.subr.bf16.mxu0 0
      %980 = vmatpush1.bf16.xpose.msra.mxu0 0
      %981 = vmatprep.mubr.bf16.mxu0 %v636
      %982 = vmatmul.mubr.bf16.gmra.mrb[0].mxu0 %v635
      %v983 = vpop.f32.mrb[0].mxu0
      %v984 = vadd.f32 0.0, %v983
      %v985 = vpop.f32.mrb[0].mxu0
      %v986 = vpop.f32.mrb[0].mxu0
      %v987 = vpop.f32.mrb[0].mxu0
      %988 = vdwg.mxu0
      %989 = vmatprep.subr.bf16.mxu0 %v934
      %990 = vmatpush1.bf16.xpose.msra.mxu0 %v933
      %991 = vmatprep.subr.bf16.mxu0 %v936
      %992 = vmatpush1.bf16.xpose.msra.mxu0 %v935
      %993 = vmatprep.subr.bf16.mxu0 %v938
      %994 = vmatpush1.bf16.xpose.msra.mxu0 %v937
      %995 = vmatprep.subr.bf16.mxu0 %v940
      %996 = vmatpush1.bf16.xpose.msra.mxu0 %v939
      %997 = vmatprep.subr.bf16.mxu0 %v942
      %998 = vmatpush1.bf16.xpose.msra.mxu0 %v941
      %999 = vmatprep.subr.bf16.mxu0 %v944
      %1000 = vmatpush1.bf16.xpose.msra.mxu0 %v943
      %1001 = vmatprep.subr.bf16.mxu0 %v946
      %1002 = vmatpush1.bf16.xpose.msra.mxu0 %v945
      %1003 = vmatprep.subr.bf16.mxu0 %v948
      %1004 = vmatpush1.bf16.xpose.msra.mxu0 %v947
      %1005 = vmatprep.subr.bf16.mxu0 0
      %1006 = vmatpush1.bf16.xpose.msra.mxu0 0
      %1007 = vmatprep.subr.bf16.mxu0 0
      %1008 = vmatpush1.bf16.xpose.msra.mxu0 0
      %1009 = vmatprep.subr.bf16.mxu0 0
      %1010 = vmatpush1.bf16.xpose.msra.mxu0 0
      %1011 = vmatprep.subr.bf16.mxu0 0
      %1012 = vmatpush1.bf16.xpose.msra.mxu0 0
      %1013 = vmatprep.subr.bf16.mxu0 0
      %1014 = vmatpush1.bf16.xpose.msra.mxu0 0
      %1015 = vmatprep.subr.bf16.mxu0 0
      %1016 = vmatpush1.bf16.xpose.msra.mxu0 0
      %1017 = vmatprep.subr.bf16.mxu0 0
      %1018 = vmatpush1.bf16.xpose.msra.mxu0 0
      %1019 = vmatprep.subr.bf16.mxu0 0
      %1020 = vmatpush1.bf16.xpose.msra.mxu0 0
      %1021 = vmatprep.mubr.bf16.mxu0 1065369472
      %1022 = vmatmul.mubr.bf16.gmra.mrb[0].mxu0 1065369472
      %v1023 = vpop.f32.mrb[0].mxu0
      %v1024 = vadd.f32 0.0, %v1023
      %v1025 = vpop.f32.mrb[0].mxu0
      %v1026 = vpop.f32.mrb[0].mxu0
      %v1027 = vpop.f32.mrb[0].mxu0
      %1028 = vdwg.mxu0
      %v1029 = vrcp.pop %v1024
      %v1030 = vlaneseq
      %v1031 = vshrl.u32 %v1030, 7
      %v1032 = vsub.s32 0, %v1031
      %v1033 = vrot.slane %v1029, %v1032
      %v1034 = vmul.f32 %v984, %v1033
      %v1035 = vpack.c.bf16 %v618, %v617
      %v1036 = vpack.c.bf16 %v620, %v619
      %v1037 = vpack.c.bf16 %v622, %v621
      %v1038 = vpack.c.bf16 %v624, %v623
      %v1039 = vpack.c.bf16 %v626, %v625
      %v1040 = vpack.c.bf16 %v628, %v627
      %v1041 = vpack.c.bf16 %v630, %v629
      %v1042 = vpack.c.bf16 %v632, %v631
      %v1044 = vsel %vm449, %v1035, 0
      %v1047 = vsel %vm449, %v1036, 0
      %v1050 = vsel %vm449, %v1037, 0
      %v1053 = vsel %vm449, %v1038, 0
      %v1056 = vsel %vm449, %v1039, 0
      %v1059 = vsel %vm449, %v1040, 0
      %v1062 = vsel %vm449, %v1041, 0
      %v1065 = vsel %vm449, %v1042, 0
      %1067 = vmatprep.subr.bf16.mxu0 %v674
      %1068 = vmatpush1.bf16.msra.mxu0 %v671
      %1069 = vmatprep.subr.bf16.mxu0 0
      %1070 = vmatpush1.bf16.msra.mxu0 0
      %1071 = vmatprep.subr.bf16.mxu0 0
      %1072 = vmatpush1.bf16.msra.mxu0 0
      %1073 = vmatprep.subr.bf16.mxu0 0
      %1074 = vmatpush1.bf16.msra.mxu0 0
      %1075 = vmatprep.subr.bf16.mxu0 0
      %1076 = vmatpush1.bf16.msra.mxu0 0
      %1077 = vmatprep.subr.bf16.mxu0 0
      %1078 = vmatpush1.bf16.msra.mxu0 0
      %1079 = vmatprep.subr.bf16.mxu0 0
      %1080 = vmatpush1.bf16.msra.mxu0 0
      %1081 = vmatprep.subr.bf16.mxu0 0
      %1082 = vmatpush1.bf16.msra.mxu0 0
      %1083 = vmatprep.subr.bf16.mxu0 0
      %1084 = vmatpush1.bf16.msra.mxu0 0
      %1085 = vmatprep.subr.bf16.mxu0 0
      %1086 = vmatpush1.bf16.msra.mxu0 0
      %1087 = vmatprep.subr.bf16.mxu0 0
      %1088 = vmatpush1.bf16.msra.mxu0 0
      %1089 = vmatprep.subr.bf16.mxu0 0
      %1090 = vmatpush1.bf16.msra.mxu0 0
      %1091 = vmatprep.subr.bf16.mxu0 0
      %1092 = vmatpush1.bf16.msra.mxu0 0
      %1093 = vmatprep.subr.bf16.mxu0 0
      %1094 = vmatpush1.bf16.msra.mxu0 0
      %1095 = vmatprep.subr.bf16.mxu0 0
      %1096 = vmatpush1.bf16.msra.mxu0 0
      %1097 = vmatprep.subr.bf16.mxu0 0
      %1098 = vmatpush1.bf16.msra.mxu0 0
      %1099 = vmatprep.mubr.bf16.mxu0 0
      %1100 = vmatmul.mubr.bf16.gmra.mrb[0].mxu0 %v1044
      %v1101 = vpop.f32.mrb[0].mxu0
      %v1102 = vadd.f32 0.0, %v1101
      %v1103 = vpop.f32.mrb[0].mxu0
      %v1104 = vadd.f32 0.0, %v1103
      %v1105 = vpop.f32.mrb[0].mxu0
      %v1106 = vadd.f32 0.0, %v1105
      %v1107 = vpop.f32.mrb[0].mxu0
      %v1108 = vadd.f32 0.0, %v1107
      %1109 = vmatprep.mubr.bf16.mxu0 0
      %1110 = vmatmul.mubr.bf16.gmra.mrb[0].mxu0 %v1047
      %v1111 = vpop.f32.mrb[0].mxu0
      %v1112 = vadd.f32 0.0, %v1111
      %v1113 = vpop.f32.mrb[0].mxu0
      %v1114 = vadd.f32 0.0, %v1113
      %v1115 = vpop.f32.mrb[0].mxu0
      %v1116 = vadd.f32 0.0, %v1115
      %v1117 = vpop.f32.mrb[0].mxu0
      %v1118 = vadd.f32 0.0, %v1117
      %1119 = vmatprep.mubr.bf16.mxu0 0
      %1120 = vmatmul.mubr.bf16.gmra.mrb[0].mxu0 %v1050
      %v1121 = vpop.f32.mrb[0].mxu0
      %v1122 = vadd.f32 0.0, %v1121
      %v1123 = vpop.f32.mrb[0].mxu0
      %v1124 = vadd.f32 0.0, %v1123
      %v1125 = vpop.f32.mrb[0].mxu0
      %v1126 = vadd.f32 0.0, %v1125
      %v1127 = vpop.f32.mrb[0].mxu0
      %v1128 = vadd.f32 0.0, %v1127
      %1129 = vmatprep.mubr.bf16.mxu0 0
      %1130 = vmatmul.mubr.bf16.gmra.mrb[0].mxu0 %v1053
      %v1131 = vpop.f32.mrb[0].mxu0
      %v1132 = vadd.f32 0.0, %v1131
      %v1133 = vpop.f32.mrb[0].mxu0
      %v1134 = vadd.f32 0.0, %v1133
      %v1135 = vpop.f32.mrb[0].mxu0
      %v1136 = vadd.f32 0.0, %v1135
      %v1137 = vpop.f32.mrb[0].mxu0
      %v1138 = vadd.f32 0.0, %v1137
      %1139 = vmatprep.mubr.bf16.mxu0 0
      %1140 = vmatmul.mubr.bf16.gmra.mrb[0].mxu0 %v1056
      %v1141 = vpop.f32.mrb[0].mxu0
      %v1142 = vadd.f32 0.0, %v1141
      %v1143 = vpop.f32.mrb[0].mxu0
      %v1144 = vadd.f32 0.0, %v1143
      %v1145 = vpop.f32.mrb[0].mxu0
      %v1146 = vadd.f32 0.0, %v1145
      %v1147 = vpop.f32.mrb[0].mxu0
      %v1148 = vadd.f32 0.0, %v1147
      %1149 = vmatprep.mubr.bf16.mxu0 0
      %1150 = vmatmul.mubr.bf16.gmra.mrb[0].mxu0 %v1059
      %v1151 = vpop.f32.mrb[0].mxu0
      %v1152 = vadd.f32 0.0, %v1151
      %v1153 = vpop.f32.mrb[0].mxu0
      %v1154 = vadd.f32 0.0, %v1153
      %v1155 = vpop.f32.mrb[0].mxu0
      %v1156 = vadd.f32 0.0, %v1155
      %v1157 = vpop.f32.mrb[0].mxu0
      %v1158 = vadd.f32 0.0, %v1157
      %1159 = vmatprep.mubr.bf16.mxu0 0
      %1160 = vmatmul.mubr.bf16.gmra.mrb[0].mxu0 %v1062
      %v1161 = vpop.f32.mrb[0].mxu0
      %v1162 = vadd.f32 0.0, %v1161
      %v1163 = vpop.f32.mrb[0].mxu0
      %v1164 = vadd.f32 0.0, %v1163
      %v1165 = vpop.f32.mrb[0].mxu0
      %v1166 = vadd.f32 0.0, %v1165
      %v1167 = vpop.f32.mrb[0].mxu0
      %v1168 = vadd.f32 0.0, %v1167
      %1169 = vmatprep.mubr.bf16.mxu0 0
      %1170 = vmatmul.mubr.bf16.gmra.mrb[0].mxu0 %v1065
      %v1171 = vpop.f32.mrb[0].mxu0
      %v1172 = vadd.f32 0.0, %v1171
      %v1173 = vpop.f32.mrb[0].mxu0
      %v1174 = vadd.f32 0.0, %v1173
      %v1175 = vpop.f32.mrb[0].mxu0
      %v1176 = vadd.f32 0.0, %v1175
      %v1177 = vpop.f32.mrb[0].mxu0
      %v1178 = vadd.f32 0.0, %v1177
      %1179 = vdwg.mxu0
      %v1180 = vmax.f32 %v1102, %v1104
      %1181 = vmax.xlane.f32.xlu0 %v1180
      %v1182 = vpop.xlane.xlu0 %1181
      %v1183 = vmax.f32 %v1106, %v1108
      %1184 = vmax.xlane.f32.xlu0 %v1183
      %v1185 = vpop.xlane.xlu0 %1184
      %v1186 = vmax.f32 %v1112, %v1114
      %1187 = vmax.xlane.f32.xlu0 %v1186
      %v1188 = vpop.xlane.xlu0 %1187
      %v1189 = vmax.f32 %v1116, %v1118
      %1190 = vmax.xlane.f32.xlu0 %v1189
      %v1191 = vpop.xlane.xlu0 %1190
      %v1192 = vmax.f32 %v1122, %v1124
      %1193 = vmax.xlane.f32.xlu0 %v1192
      %v1194 = vpop.xlane.xlu0 %1193
      %v1195 = vmax.f32 %v1126, %v1128
      %1196 = vmax.xlane.f32.xlu0 %v1195
      %v1197 = vpop.xlane.xlu0 %1196
      %v1198 = vmax.f32 %v1132, %v1134
      %1199 = vmax.xlane.f32.xlu0 %v1198
      %v1200 = vpop.xlane.xlu0 %1199
      %v1201 = vmax.f32 %v1136, %v1138
      %1202 = vmax.xlane.f32.xlu0 %v1201
      %v1203 = vpop.xlane.xlu0 %1202
      %v1204 = vmax.f32 %v1142, %v1144
      %1205 = vmax.xlane.f32.xlu0 %v1204
      %v1206 = vpop.xlane.xlu0 %1205
      %v1207 = vmax.f32 %v1146, %v1148
      %1208 = vmax.xlane.f32.xlu0 %v1207
      %v1209 = vpop.xlane.xlu0 %1208
      %v1210 = vmax.f32 %v1152, %v1154
      %1211 = vmax.xlane.f32.xlu0 %v1210
      %v1212 = vpop.xlane.xlu0 %1211
      %v1213 = vmax.f32 %v1156, %v1158
      %1214 = vmax.xlane.f32.xlu0 %v1213
      %v1215 = vpop.xlane.xlu0 %1214
      %v1216 = vmax.f32 %v1162, %v1164
      %1217 = vmax.xlane.f32.xlu0 %v1216
      %v1218 = vpop.xlane.xlu0 %1217
      %v1219 = vmax.f32 %v1166, %v1168
      %1220 = vmax.xlane.f32.xlu0 %v1219
      %v1221 = vpop.xlane.xlu0 %1220
      %v1222 = vmax.f32 %v1172, %v1174
      %1223 = vmax.xlane.f32.xlu0 %v1222
      %v1224 = vpop.xlane.xlu0 %1223
      %v1225 = vmax.f32 %v1176, %v1178
      %1226 = vmax.xlane.f32.xlu0 %v1225
      %v1227 = vpop.xlane.xlu0 %1226
      %v1228 = vsub.f32 %v1102, %v1182
      %v1229 = vsub.f32 %v1104, %v1182
      %v1230 = vsub.f32 %v1106, %v1185
      %v1231 = vsub.f32 %v1108, %v1185
      %v1232 = vsub.f32 %v1112, %v1188
      %v1233 = vsub.f32 %v1114, %v1188
      %v1234 = vsub.f32 %v1116, %v1191
      %v1235 = vsub.f32 %v1118, %v1191
      %v1236 = vsub.f32 %v1122, %v1194
      %v1237 = vsub.f32 %v1124, %v1194
      %v1238 = vsub.f32 %v1126, %v1197
      %v1239 = vsub.f32 %v1128, %v1197
      %v1240 = vsub.f32 %v1132, %v1200
      %v1241 = vsub.f32 %v1134, %v1200
      %v1242 = vsub.f32 %v1136, %v1203
      %v1243 = vsub.f32 %v1138, %v1203
      %v1244 = vsub.f32 %v1142, %v1206
      %v1245 = vsub.f32 %v1144, %v1206
      %v1246 = vsub.f32 %v1146, %v1209
      %v1247 = vsub.f32 %v1148, %v1209
      %v1248 = vsub.f32 %v1152, %v1212
      %v1249 = vsub.f32 %v1154, %v1212
      %v1250 = vsub.f32 %v1156, %v1215
      %v1251 = vsub.f32 %v1158, %v1215
      %v1252 = vsub.f32 %v1162, %v1218
      %v1253 = vsub.f32 %v1164, %v1218
      %v1254 = vsub.f32 %v1166, %v1221
      %v1255 = vsub.f32 %v1168, %v1221
      %v1256 = vsub.f32 %v1172, %v1224
      %v1257 = vsub.f32 %v1174, %v1224
      %v1258 = vsub.f32 %v1176, %v1227
      %v1259 = vsub.f32 %v1178, %v1227
      %v1260 = vmul.f32 %v1228, 1.442695
      %v1261 = vpow.pop %v1260
      %v1262 = vmul.f32 %v1229, 1.442695
      %v1263 = vpow.pop %v1262
      %v1264 = vmul.f32 %v1230, 1.442695
      %v1265 = vpow.pop %v1264
      %v1266 = vmul.f32 %v1231, 1.442695
      %v1267 = vpow.pop %v1266
      %v1268 = vmul.f32 %v1232, 1.442695
      %v1269 = vpow.pop %v1268
      %v1270 = vmul.f32 %v1233, 1.442695
      %v1271 = vpow.pop %v1270
      %v1272 = vmul.f32 %v1234, 1.442695
      %v1273 = vpow.pop %v1272
      %v1274 = vmul.f32 %v1235, 1.442695
      %v1275 = vpow.pop %v1274
      %v1276 = vmul.f32 %v1236, 1.442695
      %v1277 = vpow.pop %v1276
      %v1278 = vmul.f32 %v1237, 1.442695
      %v1279 = vpow.pop %v1278
      %v1280 = vmul.f32 %v1238, 1.442695
      %v1281 = vpow.pop %v1280
      %v1282 = vmul.f32 %v1239, 1.442695
      %v1283 = vpow.pop %v1282
      %v1284 = vmul.f32 %v1240, 1.442695
      %v1285 = vpow.pop %v1284
      %v1286 = vmul.f32 %v1241, 1.442695
      %v1287 = vpow.pop %v1286
      %v1288 = vmul.f32 %v1242, 1.442695
      %v1289 = vpow.pop %v1288
      %v1290 = vmul.f32 %v1243, 1.442695
      %v1291 = vpow.pop %v1290
      %v1292 = vmul.f32 %v1244, 1.442695
      %v1293 = vpow.pop %v1292
      %v1294 = vmul.f32 %v1245, 1.442695
      %v1295 = vpow.pop %v1294
      %v1296 = vmul.f32 %v1246, 1.442695
      %v1297 = vpow.pop %v1296
      %v1298 = vmul.f32 %v1247, 1.442695
      %v1299 = vpow.pop %v1298
      %v1300 = vmul.f32 %v1248, 1.442695
      %v1301 = vpow.pop %v1300
      %v1302 = vmul.f32 %v1249, 1.442695
      %v1303 = vpow.pop %v1302
      %v1304 = vmul.f32 %v1250, 1.442695
      %v1305 = vpow.pop %v1304
      %v1306 = vmul.f32 %v1251, 1.442695
      %v1307 = vpow.pop %v1306
      %v1308 = vmul.f32 %v1252, 1.442695
      %v1309 = vpow.pop %v1308
      %v1310 = vmul.f32 %v1253, 1.442695
      %v1311 = vpow.pop %v1310
      %v1312 = vmul.f32 %v1254, 1.442695
      %v1313 = vpow.pop %v1312
      %v1314 = vmul.f32 %v1255, 1.442695
      %v1315 = vpow.pop %v1314
      %v1316 = vmul.f32 %v1256, 1.442695
      %v1317 = vpow.pop %v1316
      %v1318 = vmul.f32 %v1257, 1.442695
      %v1319 = vpow.pop %v1318
      %v1320 = vmul.f32 %v1258, 1.442695
      %v1321 = vpow.pop %v1320
      %v1322 = vmul.f32 %v1259, 1.442695
      %v1323 = vpow.pop %v1322
      %v1324 = vpack.c.bf16 %v1265, %v1261
      %v1325 = vpack.c.bf16 %v1267, %v1263
      %v1326 = vpack.c.bf16 %v1273, %v1269
      %v1327 = vpack.c.bf16 %v1275, %v1271
      %v1328 = vpack.c.bf16 %v1281, %v1277
      %v1329 = vpack.c.bf16 %v1283, %v1279
      %v1330 = vpack.c.bf16 %v1289, %v1285
      %v1331 = vpack.c.bf16 %v1291, %v1287
      %v1332 = vpack.c.bf16 %v1297, %v1293
      %v1333 = vpack.c.bf16 %v1299, %v1295
      %v1334 = vpack.c.bf16 %v1305, %v1301
      %v1335 = vpack.c.bf16 %v1307, %v1303
      %v1336 = vpack.c.bf16 %v1313, %v1309
      %v1337 = vpack.c.bf16 %v1315, %v1311
      %v1338 = vpack.c.bf16 %v1321, %v1317
      %v1339 = vpack.c.bf16 %v1323, %v1319
      %1340 = vmatprep.subr.bf16.mxu0 %v1325
      %1341 = vmatpush1.bf16.xpose.msra.mxu0 %v1324
      %1342 = vmatprep.subr.bf16.mxu0 %v1327
      %1343 = vmatpush1.bf16.xpose.msra.mxu0 %v1326
      %1344 = vmatprep.subr.bf16.mxu0 %v1329
      %1345 = vmatpush1.bf16.xpose.msra.mxu0 %v1328
      %1346 = vmatprep.subr.bf16.mxu0 %v1331
      %1347 = vmatpush1.bf16.xpose.msra.mxu0 %v1330
      %1348 = vmatprep.subr.bf16.mxu0 %v1333
      %1349 = vmatpush1.bf16.xpose.msra.mxu0 %v1332
      %1350 = vmatprep.subr.bf16.mxu0 %v1335
      %1351 = vmatpush1.bf16.xpose.msra.mxu0 %v1334
      %1352 = vmatprep.subr.bf16.mxu0 %v1337
      %1353 = vmatpush1.bf16.xpose.msra.mxu0 %v1336
      %1354 = vmatprep.subr.bf16.mxu0 %v1339
      %1355 = vmatpush1.bf16.xpose.msra.mxu0 %v1338
      %1356 = vmatprep.subr.bf16.mxu0 0
      %1357 = vmatpush1.bf16.xpose.msra.mxu0 0
      %1358 = vmatprep.subr.bf16.mxu0 0
      %1359 = vmatpush1.bf16.xpose.msra.mxu0 0
      %1360 = vmatprep.subr.bf16.mxu0 0
      %1361 = vmatpush1.bf16.xpose.msra.mxu0 0
      %1362 = vmatprep.subr.bf16.mxu0 0
      %1363 = vmatpush1.bf16.xpose.msra.mxu0 0
      %1364 = vmatprep.subr.bf16.mxu0 0
      %1365 = vmatpush1.bf16.xpose.msra.mxu0 0
      %1366 = vmatprep.subr.bf16.mxu0 0
      %1367 = vmatpush1.bf16.xpose.msra.mxu0 0
      %1368 = vmatprep.subr.bf16.mxu0 0
      %1369 = vmatpush1.bf16.xpose.msra.mxu0 0
      %1370 = vmatprep.subr.bf16.mxu0 0
      %1371 = vmatpush1.bf16.xpose.msra.mxu0 0
      %1372 = vmatprep.mubr.bf16.mxu0 %v636
      %1373 = vmatmul.mubr.bf16.gmra.mrb[0].mxu0 %v635
      %v1374 = vpop.f32.mrb[0].mxu0
      %v1375 = vadd.f32 0.0, %v1374
      %v1376 = vpop.f32.mrb[0].mxu0
      %v1377 = vpop.f32.mrb[0].mxu0
      %v1378 = vpop.f32.mrb[0].mxu0
      %1379 = vdwg.mxu0
      %1380 = vmatprep.subr.bf16.mxu0 %v1325
      %1381 = vmatpush1.bf16.xpose.msra.mxu0 %v1324
      %1382 = vmatprep.subr.bf16.mxu0 %v1327
      %1383 = vmatpush1.bf16.xpose.msra.mxu0 %v1326
      %1384 = vmatprep.subr.bf16.mxu0 %v1329
      %1385 = vmatpush1.bf16.xpose.msra.mxu0 %v1328
      %1386 = vmatprep.subr.bf16.mxu0 %v1331
      %1387 = vmatpush1.bf16.xpose.msra.mxu0 %v1330
      %1388 = vmatprep.subr.bf16.mxu0 %v1333
      %1389 = vmatpush1.bf16.xpose.msra.mxu0 %v1332
      %1390 = vmatprep.subr.bf16.mxu0 %v1335
      %1391 = vmatpush1.bf16.xpose.msra.mxu0 %v1334
      %1392 = vmatprep.subr.bf16.mxu0 %v1337
      %1393 = vmatpush1.bf16.xpose.msra.mxu0 %v1336
      %1394 = vmatprep.subr.bf16.mxu0 %v1339
      %1395 = vmatpush1.bf16.xpose.msra.mxu0 %v1338
      %1396 = vmatprep.subr.bf16.mxu0 0
      %1397 = vmatpush1.bf16.xpose.msra.mxu0 0
      %1398 = vmatprep.subr.bf16.mxu0 0
      %1399 = vmatpush1.bf16.xpose.msra.mxu0 0
      %1400 = vmatprep.subr.bf16.mxu0 0
      %1401 = vmatpush1.bf16.xpose.msra.mxu0 0
      %1402 = vmatprep.subr.bf16.mxu0 0
      %1403 = vmatpush1.bf16.xpose.msra.mxu0 0
      %1404 = vmatprep.subr.bf16.mxu0 0
      %1405 = vmatpush1.bf16.xpose.msra.mxu0 0
      %1406 = vmatprep.subr.bf16.mxu0 0
      %1407 = vmatpush1.bf16.xpose.msra.mxu0 0
      %1408 = vmatprep.subr.bf16.mxu0 0
      %1409 = vmatpush1.bf16.xpose.msra.mxu0 0
      %1410 = vmatprep.subr.bf16.mxu0 0
      %1411 = vmatpush1.bf16.xpose.msra.mxu0 0
      %1412 = vmatprep.mubr.bf16.mxu0 1065369472
      %1413 = vmatmul.mubr.bf16.gmra.mrb[0].mxu0 1065369472
      %v1414 = vpop.f32.mrb[0].mxu0
      %v1415 = vadd.f32 0.0, %v1414
      %v1416 = vpop.f32.mrb[0].mxu0
      %v1417 = vpop.f32.mrb[0].mxu0
      %v1418 = vpop.f32.mrb[0].mxu0
      %1419 = vdwg.mxu0
      %v1420 = vrcp.pop %v1415
      %v1421 = vlaneseq
      %v1422 = vshrl.u32 %v1421, 7
      %v1423 = vsub.s32 0, %v1422
      %v1424 = vrot.slane %v1420, %v1423
      %v1425 = vmul.f32 %v1375, %v1424
      %v1426 = vpack.c.bf16 %v553, %v553
      %v1427 = vpack.c.bf16 %v555, %v555
      %v1428 = vpack.c.bf16 %v565, %v565
      %v1429 = vpack.c.bf16 %v567, %v567
      %1438 = vrot.lane.b32.xlu0 %v637, 120
      %v1439 = vpop.permute.xlu0 %1438
      %1440 = vrot.lane.b32.xlu0 %v638, 120
      %v1441 = vpop.permute.xlu0 %1440
      %1442 = vrot.lane.b32.xlu0 %v639, 120
      %v1443 = vpop.permute.xlu0 %1442
      %1444 = vrot.lane.b32.xlu0 %v640, 120
      %v1445 = vpop.permute.xlu0 %1444
      %1446 = vrot.lane.b32.xlu0 %v641, 120
      %v1447 = vpop.permute.xlu0 %1446
      %1448 = vrot.lane.b32.xlu0 %v642, 120
      %v1449 = vpop.permute.xlu0 %1448
      %1450 = vrot.lane.b32.xlu0 %v643, 120
      %v1451 = vpop.permute.xlu0 %1450
      %1452 = vrot.lane.b32.xlu0 %v644, 120
      %v1453 = vpop.permute.xlu0 %1452
      %v1455 = vsel %vm449, %v1439, 0
      %v1458 = vsel %vm449, %v1441, 0
      %v1461 = vsel %vm449, %v1443, 0
      %v1464 = vsel %vm449, %v1445, 0
      %v1467 = vsel %vm449, %v1447, 0
      %v1470 = vsel %vm449, %v1449, 0
      %v1473 = vsel %vm449, %v1451, 0
      %v1476 = vsel %vm449, %v1453, 0
      %v1479 = vsel %vm669, %v1426, 0
      %v1482 = vsel %vm669, %v1427, 0
      %1484 = vmatprep.subr.bf16.mxu0 %v1482
      %1485 = vmatpush1.bf16.msra.mxu0 %v1479
      %1486 = vmatprep.subr.bf16.mxu0 0
      %1487 = vmatpush1.bf16.msra.mxu0 0
      %1488 = vmatprep.subr.bf16.mxu0 0
      %1489 = vmatpush1.bf16.msra.mxu0 0
      %1490 = vmatprep.subr.bf16.mxu0 0
      %1491 = vmatpush1.bf16.msra.mxu0 0
      %1492 = vmatprep.subr.bf16.mxu0 0
      %1493 = vmatpush1.bf16.msra.mxu0 0
      %1494 = vmatprep.subr.bf16.mxu0 0
      %1495 = vmatpush1.bf16.msra.mxu0 0
      %1496 = vmatprep.subr.bf16.mxu0 0
      %1497 = vmatpush1.bf16.msra.mxu0 0
      %1498 = vmatprep.subr.bf16.mxu0 0
      %1499 = vmatpush1.bf16.msra.mxu0 0
      %1500 = vmatprep.subr.bf16.mxu0 0
      %1501 = vmatpush1.bf16.msra.mxu0 0
      %1502 = vmatprep.subr.bf16.mxu0 0
      %1503 = vmatpush1.bf16.msra.mxu0 0
      %1504 = vmatprep.subr.bf16.mxu0 0
      %1505 = vmatpush1.bf16.msra.mxu0 0
      %1506 = vmatprep.subr.bf16.mxu0 0
      %1507 = vmatpush1.bf16.msra.mxu0 0
      %1508 = vmatprep.subr.bf16.mxu0 0
      %1509 = vmatpush1.bf16.msra.mxu0 0
      %1510 = vmatprep.subr.bf16.mxu0 0
      %1511 = vmatpush1.bf16.msra.mxu0 0
      %1512 = vmatprep.subr.bf16.mxu0 0
      %1513 = vmatpush1.bf16.msra.mxu0 0
      %1514 = vmatprep.subr.bf16.mxu0 0
      %1515 = vmatpush1.bf16.msra.mxu0 0
      %1516 = vmatprep.mubr.bf16.mxu0 0
      %1517 = vmatmul.mubr.bf16.gmra.mrb[0].mxu0 %v1455
      %v1518 = vpop.f32.mrb[0].mxu0
      %v1519 = vadd.f32 0.0, %v1518
      %v1520 = vpop.f32.mrb[0].mxu0
      %v1521 = vadd.f32 0.0, %v1520
      %v1522 = vpop.f32.mrb[0].mxu0
      %v1523 = vadd.f32 0.0, %v1522
      %v1524 = vpop.f32.mrb[0].mxu0
      %v1525 = vadd.f32 0.0, %v1524
      %1526 = vmatprep.mubr.bf16.mxu0 0
      %1527 = vmatmul.mubr.bf16.gmra.mrb[0].mxu0 %v1458
      %v1528 = vpop.f32.mrb[0].mxu0
      %v1529 = vadd.f32 0.0, %v1528
      %v1530 = vpop.f32.mrb[0].mxu0
      %v1531 = vadd.f32 0.0, %v1530
      %v1532 = vpop.f32.mrb[0].mxu0
      %v1533 = vadd.f32 0.0, %v1532
      %v1534 = vpop.f32.mrb[0].mxu0
      %v1535 = vadd.f32 0.0, %v1534
      %1536 = vmatprep.mubr.bf16.mxu0 0
      %1537 = vmatmul.mubr.bf16.gmra.mrb[0].mxu0 %v1461
      %v1538 = vpop.f32.mrb[0].mxu0
      %v1539 = vadd.f32 0.0, %v1538
      %v1540 = vpop.f32.mrb[0].mxu0
      %v1541 = vadd.f32 0.0, %v1540
      %v1542 = vpop.f32.mrb[0].mxu0
      %v1543 = vadd.f32 0.0, %v1542
      %v1544 = vpop.f32.mrb[0].mxu0
      %v1545 = vadd.f32 0.0, %v1544
      %1546 = vmatprep.mubr.bf16.mxu0 0
      %1547 = vmatmul.mubr.bf16.gmra.mrb[0].mxu0 %v1464
      %v1548 = vpop.f32.mrb[0].mxu0
      %v1549 = vadd.f32 0.0, %v1548
      %v1550 = vpop.f32.mrb[0].mxu0
      %v1551 = vadd.f32 0.0, %v1550
      %v1552 = vpop.f32.mrb[0].mxu0
      %v1553 = vadd.f32 0.0, %v1552
      %v1554 = vpop.f32.mrb[0].mxu0
      %v1555 = vadd.f32 0.0, %v1554
      %1556 = vmatprep.mubr.bf16.mxu0 0
      %1557 = vmatmul.mubr.bf16.gmra.mrb[0].mxu0 %v1467
      %v1558 = vpop.f32.mrb[0].mxu0
      %v1559 = vadd.f32 0.0, %v1558
      %v1560 = vpop.f32.mrb[0].mxu0
      %v1561 = vadd.f32 0.0, %v1560
      %v1562 = vpop.f32.mrb[0].mxu0
      %v1563 = vadd.f32 0.0, %v1562
      %v1564 = vpop.f32.mrb[0].mxu0
      %v1565 = vadd.f32 0.0, %v1564
      %1566 = vmatprep.mubr.bf16.mxu0 0
      %1567 = vmatmul.mubr.bf16.gmra.mrb[0].mxu0 %v1470
      %v1568 = vpop.f32.mrb[0].mxu0
      %v1569 = vadd.f32 0.0, %v1568
      %v1570 = vpop.f32.mrb[0].mxu0
      %v1571 = vadd.f32 0.0, %v1570
      %v1572 = vpop.f32.mrb[0].mxu0
      %v1573 = vadd.f32 0.0, %v1572
      %v1574 = vpop.f32.mrb[0].mxu0
      %v1575 = vadd.f32 0.0, %v1574
      %1576 = vmatprep.mubr.bf16.mxu0 0
      %1577 = vmatmul.mubr.bf16.gmra.mrb[0].mxu0 %v1473
      %v1578 = vpop.f32.mrb[0].mxu0
      %v1579 = vadd.f32 0.0, %v1578
      %v1580 = vpop.f32.mrb[0].mxu0
      %v1581 = vadd.f32 0.0, %v1580
      %v1582 = vpop.f32.mrb[0].mxu0
      %v1583 = vadd.f32 0.0, %v1582
      %v1584 = vpop.f32.mrb[0].mxu0
      %v1585 = vadd.f32 0.0, %v1584
      %1586 = vmatprep.mubr.bf16.mxu0 0
      %1587 = vmatmul.mubr.bf16.gmra.mrb[0].mxu0 %v1476
      %v1588 = vpop.f32.mrb[0].mxu0
      %v1589 = vadd.f32 0.0, %v1588
      %v1590 = vpop.f32.mrb[0].mxu0
      %v1591 = vadd.f32 0.0, %v1590
      %v1592 = vpop.f32.mrb[0].mxu0
      %v1593 = vadd.f32 0.0, %v1592
      %v1594 = vpop.f32.mrb[0].mxu0
      %v1595 = vadd.f32 0.0, %v1594
      %1596 = vdwg.mxu0
      %v1597 = vmax.f32 %v1519, %v1521
      %1598 = vmax.xlane.f32.xlu0 %v1597
      %v1599 = vpop.xlane.xlu0 %1598
      %v1600 = vmax.f32 %v1523, %v1525
      %1601 = vmax.xlane.f32.xlu0 %v1600
      %v1602 = vpop.xlane.xlu0 %1601
      %v1603 = vmax.f32 %v1529, %v1531
      %1604 = vmax.xlane.f32.xlu0 %v1603
      %v1605 = vpop.xlane.xlu0 %1604
      %v1606 = vmax.f32 %v1533, %v1535
      %1607 = vmax.xlane.f32.xlu0 %v1606
      %v1608 = vpop.xlane.xlu0 %1607
      %v1609 = vmax.f32 %v1539, %v1541
      %1610 = vmax.xlane.f32.xlu0 %v1609
      %v1611 = vpop.xlane.xlu0 %1610
      %v1612 = vmax.f32 %v1543, %v1545
      %1613 = vmax.xlane.f32.xlu0 %v1612
      %v1614 = vpop.xlane.xlu0 %1613
      %v1615 = vmax.f32 %v1549, %v1551
      %1616 = vmax.xlane.f32.xlu0 %v1615
      %v1617 = vpop.xlane.xlu0 %1616
      %v1618 = vmax.f32 %v1553, %v1555
      %1619 = vmax.xlane.f32.xlu0 %v1618
      %v1620 = vpop.xlane.xlu0 %1619
      %v1621 = vmax.f32 %v1559, %v1561
      %1622 = vmax.xlane.f32.xlu0 %v1621
      %v1623 = vpop.xlane.xlu0 %1622
      %v1624 = vmax.f32 %v1563, %v1565
      %1625 = vmax.xlane.f32.xlu0 %v1624
      %v1626 = vpop.xlane.xlu0 %1625
      %v1627 = vmax.f32 %v1569, %v1571
      %1628 = vmax.xlane.f32.xlu0 %v1627
      %v1629 = vpop.xlane.xlu0 %1628
      %v1630 = vmax.f32 %v1573, %v1575
      %1631 = vmax.xlane.f32.xlu0 %v1630
      %v1632 = vpop.xlane.xlu0 %1631
      %v1633 = vmax.f32 %v1579, %v1581
      %1634 = vmax.xlane.f32.xlu0 %v1633
      %v1635 = vpop.xlane.xlu0 %1634
      %v1636 = vmax.f32 %v1583, %v1585
      %1637 = vmax.xlane.f32.xlu0 %v1636
      %v1638 = vpop.xlane.xlu0 %1637
      %v1639 = vmax.f32 %v1589, %v1591
      %1640 = vmax.xlane.f32.xlu0 %v1639
      %v1641 = vpop.xlane.xlu0 %1640
      %v1642 = vmax.f32 %v1593, %v1595
      %1643 = vmax.xlane.f32.xlu0 %v1642
      %v1644 = vpop.xlane.xlu0 %1643
      %v1645 = vsub.f32 %v1519, %v1599
      %v1646 = vsub.f32 %v1521, %v1599
      %v1647 = vsub.f32 %v1523, %v1602
      %v1648 = vsub.f32 %v1525, %v1602
      %v1649 = vsub.f32 %v1529, %v1605
      %v1650 = vsub.f32 %v1531, %v1605
      %v1651 = vsub.f32 %v1533, %v1608
      %v1652 = vsub.f32 %v1535, %v1608
      %v1653 = vsub.f32 %v1539, %v1611
      %v1654 = vsub.f32 %v1541, %v1611
      %v1655 = vsub.f32 %v1543, %v1614
      %v1656 = vsub.f32 %v1545, %v1614
      %v1657 = vsub.f32 %v1549, %v1617
      %v1658 = vsub.f32 %v1551, %v1617
      %v1659 = vsub.f32 %v1553, %v1620
      %v1660 = vsub.f32 %v1555, %v1620
      %v1661 = vsub.f32 %v1559, %v1623
      %v1662 = vsub.f32 %v1561, %v1623
      %v1663 = vsub.f32 %v1563, %v1626
      %v1664 = vsub.f32 %v1565, %v1626
      %v1665 = vsub.f32 %v1569, %v1629
      %v1666 = vsub.f32 %v1571, %v1629
      %v1667 = vsub.f32 %v1573, %v1632
      %v1668 = vsub.f32 %v1575, %v1632
      %v1669 = vsub.f32 %v1579, %v1635
      %v1670 = vsub.f32 %v1581, %v1635
      %v1671 = vsub.f32 %v1583, %v1638
      %v1672 = vsub.f32 %v1585, %v1638
      %v1673 = vsub.f32 %v1589, %v1641
      %v1674 = vsub.f32 %v1591, %v1641
      %v1675 = vsub.f32 %v1593, %v1644
      %v1676 = vsub.f32 %v1595, %v1644
      %v1677 = vmul.f32 %v1645, 1.442695
      %v1678 = vpow.pop %v1677
      %v1679 = vmul.f32 %v1646, 1.442695
      %v1680 = vpow.pop %v1679
      %v1681 = vmul.f32 %v1647, 1.442695
      %v1682 = vpow.pop %v1681
      %v1683 = vmul.f32 %v1648, 1.442695
      %v1684 = vpow.pop %v1683
      %v1685 = vmul.f32 %v1649, 1.442695
      %v1686 = vpow.pop %v1685
      %v1687 = vmul.f32 %v1650, 1.442695
      %v1688 = vpow.pop %v1687
      %v1689 = vmul.f32 %v1651, 1.442695
      %v1690 = vpow.pop %v1689
      %v1691 = vmul.f32 %v1652, 1.442695
      %v1692 = vpow.pop %v1691
      %v1693 = vmul.f32 %v1653, 1.442695
      %v1694 = vpow.pop %v1693
      %v1695 = vmul.f32 %v1654, 1.442695
      %v1696 = vpow.pop %v1695
      %v1697 = vmul.f32 %v1655, 1.442695
      %v1698 = vpow.pop %v1697
      %v1699 = vmul.f32 %v1656, 1.442695
      %v1700 = vpow.pop %v1699
      %v1701 = vmul.f32 %v1657, 1.442695
      %v1702 = vpow.pop %v1701
      %v1703 = vmul.f32 %v1658, 1.442695
      %v1704 = vpow.pop %v1703
      %v1705 = vmul.f32 %v1659, 1.442695
      %v1706 = vpow.pop %v1705
      %v1707 = vmul.f32 %v1660, 1.442695
      %v1708 = vpow.pop %v1707
      %v1709 = vmul.f32 %v1661, 1.442695
      %v1710 = vpow.pop %v1709
      %v1711 = vmul.f32 %v1662, 1.442695
      %v1712 = vpow.pop %v1711
      %v1713 = vmul.f32 %v1663, 1.442695
      %v1714 = vpow.pop %v1713
      %v1715 = vmul.f32 %v1664, 1.442695
      %v1716 = vpow.pop %v1715
      %v1717 = vmul.f32 %v1665, 1.442695
      %v1718 = vpow.pop %v1717
      %v1719 = vmul.f32 %v1666, 1.442695
      %v1720 = vpow.pop %v1719
      %v1721 = vmul.f32 %v1667, 1.442695
      %v1722 = vpow.pop %v1721
      %v1723 = vmul.f32 %v1668, 1.442695
      %v1724 = vpow.pop %v1723
      %v1725 = vmul.f32 %v1669, 1.442695
      %v1726 = vpow.pop %v1725
      %v1727 = vmul.f32 %v1670, 1.442695
      %v1728 = vpow.pop %v1727
      %v1729 = vmul.f32 %v1671, 1.442695
      %v1730 = vpow.pop %v1729
      %v1731 = vmul.f32 %v1672, 1.442695
      %v1732 = vpow.pop %v1731
      %v1733 = vmul.f32 %v1673, 1.442695
      %v1734 = vpow.pop %v1733
      %v1735 = vmul.f32 %v1674, 1.442695
      %v1736 = vpow.pop %v1735
      %v1737 = vmul.f32 %v1675, 1.442695
      %v1738 = vpow.pop %v1737
      %v1739 = vmul.f32 %v1676, 1.442695
      %v1740 = vpow.pop %v1739
      %v1741 = vpack.c.bf16 %v1682, %v1678
      %v1742 = vpack.c.bf16 %v1684, %v1680
      %v1743 = vpack.c.bf16 %v1690, %v1686
      %v1744 = vpack.c.bf16 %v1692, %v1688
      %v1745 = vpack.c.bf16 %v1698, %v1694
      %v1746 = vpack.c.bf16 %v1700, %v1696
      %v1747 = vpack.c.bf16 %v1706, %v1702
      %v1748 = vpack.c.bf16 %v1708, %v1704
      %v1749 = vpack.c.bf16 %v1714, %v1710
      %v1750 = vpack.c.bf16 %v1716, %v1712
      %v1751 = vpack.c.bf16 %v1722, %v1718
      %v1752 = vpack.c.bf16 %v1724, %v1720
      %v1753 = vpack.c.bf16 %v1730, %v1726
      %v1754 = vpack.c.bf16 %v1732, %v1728
      %v1755 = vpack.c.bf16 %v1738, %v1734
      %v1756 = vpack.c.bf16 %v1740, %v1736
      %1757 = vmatprep.subr.bf16.mxu0 %v1742
      %1758 = vmatpush1.bf16.xpose.msra.mxu0 %v1741
      %1759 = vmatprep.subr.bf16.mxu0 %v1744
      %1760 = vmatpush1.bf16.xpose.msra.mxu0 %v1743
      %1761 = vmatprep.subr.bf16.mxu0 %v1746
      %1762 = vmatpush1.bf16.xpose.msra.mxu0 %v1745
      %1763 = vmatprep.subr.bf16.mxu0 %v1748
      %1764 = vmatpush1.bf16.xpose.msra.mxu0 %v1747
      %1765 = vmatprep.subr.bf16.mxu0 %v1750
      %1766 = vmatpush1.bf16.xpose.msra.mxu0 %v1749
      %1767 = vmatprep.subr.bf16.mxu0 %v1752
      %1768 = vmatpush1.bf16.xpose.msra.mxu0 %v1751
      %1769 = vmatprep.subr.bf16.mxu0 %v1754
      %1770 = vmatpush1.bf16.xpose.msra.mxu0 %v1753
      %1771 = vmatprep.subr.bf16.mxu0 %v1756
      %1772 = vmatpush1.bf16.xpose.msra.mxu0 %v1755
      %1773 = vmatprep.subr.bf16.mxu0 0
      %1774 = vmatpush1.bf16.xpose.msra.mxu0 0
      %1775 = vmatprep.subr.bf16.mxu0 0
      %1776 = vmatpush1.bf16.xpose.msra.mxu0 0
      %1777 = vmatprep.subr.bf16.mxu0 0
      %1778 = vmatpush1.bf16.xpose.msra.mxu0 0
      %1779 = vmatprep.subr.bf16.mxu0 0
      %1780 = vmatpush1.bf16.xpose.msra.mxu0 0
      %1781 = vmatprep.subr.bf16.mxu0 0
      %1782 = vmatpush1.bf16.xpose.msra.mxu0 0
      %1783 = vmatprep.subr.bf16.mxu0 0
      %1784 = vmatpush1.bf16.xpose.msra.mxu0 0
      %1785 = vmatprep.subr.bf16.mxu0 0
      %1786 = vmatpush1.bf16.xpose.msra.mxu0 0
      %1787 = vmatprep.subr.bf16.mxu0 0
      %1788 = vmatpush1.bf16.xpose.msra.mxu0 0
      %1789 = vmatprep.mubr.bf16.mxu0 %v1429
      %1790 = vmatmul.mubr.bf16.gmra.mrb[0].mxu0 %v1428
      %v1791 = vpop.f32.mrb[0].mxu0
      %v1792 = vadd.f32 0.0, %v1791
      %v1793 = vpop.f32.mrb[0].mxu0
      %v1794 = vpop.f32.mrb[0].mxu0
      %v1795 = vpop.f32.mrb[0].mxu0
      %1796 = vdwg.mxu0
      %1797 = vmatprep.subr.bf16.mxu0 %v1742
      %1798 = vmatpush1.bf16.xpose.msra.mxu0 %v1741
      %1799 = vmatprep.subr.bf16.mxu0 %v1744
      %1800 = vmatpush1.bf16.xpose.msra.mxu0 %v1743
      %1801 = vmatprep.subr.bf16.mxu0 %v1746
      %1802 = vmatpush1.bf16.xpose.msra.mxu0 %v1745
      %1803 = vmatprep.subr.bf16.mxu0 %v1748
      %1804 = vmatpush1.bf16.xpose.msra.mxu0 %v1747
      %1805 = vmatprep.subr.bf16.mxu0 %v1750
      %1806 = vmatpush1.bf16.xpose.msra.mxu0 %v1749
      %1807 = vmatprep.subr.bf16.mxu0 %v1752
      %1808 = vmatpush1.bf16.xpose.msra.mxu0 %v1751
      %1809 = vmatprep.subr.bf16.mxu0 %v1754
      %1810 = vmatpush1.bf16.xpose.msra.mxu0 %v1753
      %1811 = vmatprep.subr.bf16.mxu0 %v1756
      %1812 = vmatpush1.bf16.xpose.msra.mxu0 %v1755
      %1813 = vmatprep.subr.bf16.mxu0 0
      %1814 = vmatpush1.bf16.xpose.msra.mxu0 0
      %1815 = vmatprep.subr.bf16.mxu0 0
      %1816 = vmatpush1.bf16.xpose.msra.mxu0 0
      %1817 = vmatprep.subr.bf16.mxu0 0
      %1818 = vmatpush1.bf16.xpose.msra.mxu0 0
      %1819 = vmatprep.subr.bf16.mxu0 0
      %1820 = vmatpush1.bf16.xpose.msra.mxu0 0
      %1821 = vmatprep.subr.bf16.mxu0 0
      %1822 = vmatpush1.bf16.xpose.msra.mxu0 0
      %1823 = vmatprep.subr.bf16.mxu0 0
      %1824 = vmatpush1.bf16.xpose.msra.mxu0 0
      %1825 = vmatprep.subr.bf16.mxu0 0
      %1826 = vmatpush1.bf16.xpose.msra.mxu0 0
      %1827 = vmatprep.subr.bf16.mxu0 0
      %1828 = vmatpush1.bf16.xpose.msra.mxu0 0
      %1829 = vmatprep.mubr.bf16.mxu0 1065369472
      %1830 = vmatmul.mubr.bf16.gmra.mrb[0].mxu0 1065369472
      %v1831 = vpop.f32.mrb[0].mxu0
      %v1832 = vadd.f32 0.0, %v1831
      %v1833 = vpop.f32.mrb[0].mxu0
      %v1834 = vpop.f32.mrb[0].mxu0
      %v1835 = vpop.f32.mrb[0].mxu0
      %1836 = vdwg.mxu0
      %v1837 = vrcp.pop %v1832
      %v1838 = vlaneseq
      %v1839 = vshrl.u32 %v1838, 7
      %v1840 = vsub.s32 0, %v1839
      %v1841 = vrot.slane %v1837, %v1840
      %v1842 = vmul.f32 %v1792, %v1841
      %1851 = vrot.lane.b32.xlu0 %v1035, 120
      %v1852 = vpop.permute.xlu0 %1851
      %1853 = vrot.lane.b32.xlu0 %v1036, 120
      %v1854 = vpop.permute.xlu0 %1853
      %1855 = vrot.lane.b32.xlu0 %v1037, 120
      %v1856 = vpop.permute.xlu0 %1855
      %1857 = vrot.lane.b32.xlu0 %v1038, 120
      %v1858 = vpop.permute.xlu0 %1857
      %1859 = vrot.lane.b32.xlu0 %v1039, 120
      %v1860 = vpop.permute.xlu0 %1859
      %1861 = vrot.lane.b32.xlu0 %v1040, 120
      %v1862 = vpop.permute.xlu0 %1861
      %1863 = vrot.lane.b32.xlu0 %v1041, 120
      %v1864 = vpop.permute.xlu0 %1863
      %1865 = vrot.lane.b32.xlu0 %v1042, 120
      %v1866 = vpop.permute.xlu0 %1865
      %v1868 = vsel %vm449, %v1852, 0
      %v1871 = vsel %vm449, %v1854, 0
      %v1874 = vsel %vm449, %v1856, 0
      %v1877 = vsel %vm449, %v1858, 0
      %v1880 = vsel %vm449, %v1860, 0
      %v1883 = vsel %vm449, %v1862, 0
      %v1886 = vsel %vm449, %v1864, 0
      %v1889 = vsel %vm449, %v1866, 0
      %1891 = vmatprep.subr.bf16.mxu0 %v1482
      %1892 = vmatpush1.bf16.msra.mxu0 %v1479
      %1893 = vmatprep.subr.bf16.mxu0 0
      %1894 = vmatpush1.bf16.msra.mxu0 0
      %1895 = vmatprep.subr.bf16.mxu0 0
      %1896 = vmatpush1.bf16.msra.mxu0 0
      %1897 = vmatprep.subr.bf16.mxu0 0
      %1898 = vmatpush1.bf16.msra.mxu0 0
      %1899 = vmatprep.subr.bf16.mxu0 0
      %1900 = vmatpush1.bf16.msra.mxu0 0
      %1901 = vmatprep.subr.bf16.mxu0 0
      %1902 = vmatpush1.bf16.msra.mxu0 0
      %1903 = vmatprep.subr.bf16.mxu0 0
      %1904 = vmatpush1.bf16.msra.mxu0 0
      %1905 = vmatprep.subr.bf16.mxu0 0
      %1906 = vmatpush1.bf16.msra.mxu0 0
      %1907 = vmatprep.subr.bf16.mxu0 0
      %1908 = vmatpush1.bf16.msra.mxu0 0
      %1909 = vmatprep.subr.bf16.mxu0 0
      %1910 = vmatpush1.bf16.msra.mxu0 0
      %1911 = vmatprep.subr.bf16.mxu0 0
      %1912 = vmatpush1.bf16.msra.mxu0 0
      %1913 = vmatprep.subr.bf16.mxu0 0
      %1914 = vmatpush1.bf16.msra.mxu0 0
      %1915 = vmatprep.subr.bf16.mxu0 0
      %1916 = vmatpush1.bf16.msra.mxu0 0
      %1917 = vmatprep.subr.bf16.mxu0 0
      %1918 = vmatpush1.bf16.msra.mxu0 0
      %1919 = vmatprep.subr.bf16.mxu0 0
      %1920 = vmatpush1.bf16.msra.mxu0 0
      %1921 = vmatprep.subr.bf16.mxu0 0
      %1922 = vmatpush1.bf16.msra.mxu0 0
      %1923 = vmatprep.mubr.bf16.mxu0 0
      %1924 = vmatmul.mubr.bf16.gmra.mrb[0].mxu0 %v1868
      %v1925 = vpop.f32.mrb[0].mxu0
      %v1926 = vadd.f32 0.0, %v1925
      %v1927 = vpop.f32.mrb[0].mxu0
      %v1928 = vadd.f32 0.0, %v1927
      %v1929 = vpop.f32.mrb[0].mxu0
      %v1930 = vadd.f32 0.0, %v1929
      %v1931 = vpop.f32.mrb[0].mxu0
      %v1932 = vadd.f32 0.0, %v1931
      %1933 = vmatprep.mubr.bf16.mxu0 0
      %1934 = vmatmul.mubr.bf16.gmra.mrb[0].mxu0 %v1871
      %v1935 = vpop.f32.mrb[0].mxu0
      %v1936 = vadd.f32 0.0, %v1935
      %v1937 = vpop.f32.mrb[0].mxu0
      %v1938 = vadd.f32 0.0, %v1937
      %v1939 = vpop.f32.mrb[0].mxu0
      %v1940 = vadd.f32 0.0, %v1939
      %v1941 = vpop.f32.mrb[0].mxu0
      %v1942 = vadd.f32 0.0, %v1941
      %1943 = vmatprep.mubr.bf16.mxu0 0
      %1944 = vmatmul.mubr.bf16.gmra.mrb[0].mxu0 %v1874
      %v1945 = vpop.f32.mrb[0].mxu0
      %v1946 = vadd.f32 0.0, %v1945
      %v1947 = vpop.f32.mrb[0].mxu0
      %v1948 = vadd.f32 0.0, %v1947
      %v1949 = vpop.f32.mrb[0].mxu0
      %v1950 = vadd.f32 0.0, %v1949
      %v1951 = vpop.f32.mrb[0].mxu0
      %v1952 = vadd.f32 0.0, %v1951
      %1953 = vmatprep.mubr.bf16.mxu0 0
      %1954 = vmatmul.mubr.bf16.gmra.mrb[0].mxu0 %v1877
      %v1955 = vpop.f32.mrb[0].mxu0
      %v1956 = vadd.f32 0.0, %v1955
      %v1957 = vpop.f32.mrb[0].mxu0
      %v1958 = vadd.f32 0.0, %v1957
      %v1959 = vpop.f32.mrb[0].mxu0
      %v1960 = vadd.f32 0.0, %v1959
      %v1961 = vpop.f32.mrb[0].mxu0
      %v1962 = vadd.f32 0.0, %v1961
      %1963 = vmatprep.mubr.bf16.mxu0 0
      %1964 = vmatmul.mubr.bf16.gmra.mrb[0].mxu0 %v1880
      %v1965 = vpop.f32.mrb[0].mxu0
      %v1966 = vadd.f32 0.0, %v1965
      %v1967 = vpop.f32.mrb[0].mxu0
      %v1968 = vadd.f32 0.0, %v1967
      %v1969 = vpop.f32.mrb[0].mxu0
      %v1970 = vadd.f32 0.0, %v1969
      %v1971 = vpop.f32.mrb[0].mxu0
      %v1972 = vadd.f32 0.0, %v1971
      %1973 = vmatprep.mubr.bf16.mxu0 0
      %1974 = vmatmul.mubr.bf16.gmra.mrb[0].mxu0 %v1883
      %v1975 = vpop.f32.mrb[0].mxu0
      %v1976 = vadd.f32 0.0, %v1975
      %v1977 = vpop.f32.mrb[0].mxu0
      %v1978 = vadd.f32 0.0, %v1977
      %v1979 = vpop.f32.mrb[0].mxu0
      %v1980 = vadd.f32 0.0, %v1979
      %v1981 = vpop.f32.mrb[0].mxu0
      %v1982 = vadd.f32 0.0, %v1981
      %1983 = vmatprep.mubr.bf16.mxu0 0
      %1984 = vmatmul.mubr.bf16.gmra.mrb[0].mxu0 %v1886
      %v1985 = vpop.f32.mrb[0].mxu0
      %v1986 = vadd.f32 0.0, %v1985
      %v1987 = vpop.f32.mrb[0].mxu0
      %v1988 = vadd.f32 0.0, %v1987
      %v1989 = vpop.f32.mrb[0].mxu0
      %v1990 = vadd.f32 0.0, %v1989
      %v1991 = vpop.f32.mrb[0].mxu0
      %v1992 = vadd.f32 0.0, %v1991
      %1993 = vmatprep.mubr.bf16.mxu0 0
      %1994 = vmatmul.mubr.bf16.gmra.mrb[0].mxu0 %v1889
      %v1995 = vpop.f32.mrb[0].mxu0
      %v1996 = vadd.f32 0.0, %v1995
      %v1997 = vpop.f32.mrb[0].mxu0
      %v1998 = vadd.f32 0.0, %v1997
      %v1999 = vpop.f32.mrb[0].mxu0
      %v2000 = vadd.f32 0.0, %v1999
      %v2001 = vpop.f32.mrb[0].mxu0
      %v2002 = vadd.f32 0.0, %v2001
      %2003 = vdwg.mxu0
      %v2004 = vmax.f32 %v1926, %v1928
      %2005 = vmax.xlane.f32.xlu0 %v2004
      %v2006 = vpop.xlane.xlu0 %2005
      %v2007 = vmax.f32 %v1930, %v1932
      %2008 = vmax.xlane.f32.xlu0 %v2007
      %v2009 = vpop.xlane.xlu0 %2008
      %v2010 = vmax.f32 %v1936, %v1938
      %2011 = vmax.xlane.f32.xlu0 %v2010
      %v2012 = vpop.xlane.xlu0 %2011
      %v2013 = vmax.f32 %v1940, %v1942
      %2014 = vmax.xlane.f32.xlu0 %v2013
      %v2015 = vpop.xlane.xlu0 %2014
      %v2016 = vmax.f32 %v1946, %v1948
      %2017 = vmax.xlane.f32.xlu0 %v2016
      %v2018 = vpop.xlane.xlu0 %2017
      %v2019 = vmax.f32 %v1950, %v1952
      %2020 = vmax.xlane.f32.xlu0 %v2019
      %v2021 = vpop.xlane.xlu0 %2020
      %v2022 = vmax.f32 %v1956, %v1958
      %2023 = vmax.xlane.f32.xlu0 %v2022
      %v2024 = vpop.xlane.xlu0 %2023
      %v2025 = vmax.f32 %v1960, %v1962
      %2026 = vmax.xlane.f32.xlu0 %v2025
      %v2027 = vpop.xlane.xlu0 %2026
      %v2028 = vmax.f32 %v1966, %v1968
      %2029 = vmax.xlane.f32.xlu0 %v2028
      %v2030 = vpop.xlane.xlu0 %2029
      %v2031 = vmax.f32 %v1970, %v1972
      %2032 = vmax.xlane.f32.xlu0 %v2031
      %v2033 = vpop.xlane.xlu0 %2032
      %v2034 = vmax.f32 %v1976, %v1978
      %2035 = vmax.xlane.f32.xlu0 %v2034
      %v2036 = vpop.xlane.xlu0 %2035
      %v2037 = vmax.f32 %v1980, %v1982
      %2038 = vmax.xlane.f32.xlu0 %v2037
      %v2039 = vpop.xlane.xlu0 %2038
      %v2040 = vmax.f32 %v1986, %v1988
      %2041 = vmax.xlane.f32.xlu0 %v2040
      %v2042 = vpop.xlane.xlu0 %2041
      %v2043 = vmax.f32 %v1990, %v1992
      %2044 = vmax.xlane.f32.xlu0 %v2043
      %v2045 = vpop.xlane.xlu0 %2044
      %v2046 = vmax.f32 %v1996, %v1998
      %2047 = vmax.xlane.f32.xlu0 %v2046
      %v2048 = vpop.xlane.xlu0 %2047
      %v2049 = vmax.f32 %v2000, %v2002
      %2050 = vmax.xlane.f32.xlu0 %v2049
      %v2051 = vpop.xlane.xlu0 %2050
      %v2052 = vsub.f32 %v1926, %v2006
      %v2053 = vsub.f32 %v1928, %v2006
      %v2054 = vsub.f32 %v1930, %v2009
      %v2055 = vsub.f32 %v1932, %v2009
      %v2056 = vsub.f32 %v1936, %v2012
      %v2057 = vsub.f32 %v1938, %v2012
      %v2058 = vsub.f32 %v1940, %v2015
      %v2059 = vsub.f32 %v1942, %v2015
      %v2060 = vsub.f32 %v1946, %v2018
      %v2061 = vsub.f32 %v1948, %v2018
      %v2062 = vsub.f32 %v1950, %v2021
      %v2063 = vsub.f32 %v1952, %v2021
      %v2064 = vsub.f32 %v1956, %v2024
      %v2065 = vsub.f32 %v1958, %v2024
      %v2066 = vsub.f32 %v1960, %v2027
      %v2067 = vsub.f32 %v1962, %v2027
      %v2068 = vsub.f32 %v1966, %v2030
      %v2069 = vsub.f32 %v1968, %v2030
      %v2070 = vsub.f32 %v1970, %v2033
      %v2071 = vsub.f32 %v1972, %v2033
      %v2072 = vsub.f32 %v1976, %v2036
      %v2073 = vsub.f32 %v1978, %v2036
      %v2074 = vsub.f32 %v1980, %v2039
      %v2075 = vsub.f32 %v1982, %v2039
      %v2076 = vsub.f32 %v1986, %v2042
      %v2077 = vsub.f32 %v1988, %v2042
      %v2078 = vsub.f32 %v1990, %v2045
      %v2079 = vsub.f32 %v1992, %v2045
      %v2080 = vsub.f32 %v1996, %v2048
      %v2081 = vsub.f32 %v1998, %v2048
      %v2082 = vsub.f32 %v2000, %v2051
      %v2083 = vsub.f32 %v2002, %v2051
      %v2084 = vmul.f32 %v2052, 1.442695
      %v2085 = vpow.pop %v2084
      %v2086 = vmul.f32 %v2053, 1.442695
      %v2087 = vpow.pop %v2086
      %v2088 = vmul.f32 %v2054, 1.442695
      %v2089 = vpow.pop %v2088
      %v2090 = vmul.f32 %v2055, 1.442695
      %v2091 = vpow.pop %v2090
      %v2092 = vmul.f32 %v2056, 1.442695
      %v2093 = vpow.pop %v2092
      %v2094 = vmul.f32 %v2057, 1.442695
      %v2095 = vpow.pop %v2094
      %v2096 = vmul.f32 %v2058, 1.442695
      %v2097 = vpow.pop %v2096
      %v2098 = vmul.f32 %v2059, 1.442695
      %v2099 = vpow.pop %v2098
      %v2100 = vmul.f32 %v2060, 1.442695
      %v2101 = vpow.pop %v2100
      %v2102 = vmul.f32 %v2061, 1.442695
      %v2103 = vpow.pop %v2102
      %v2104 = vmul.f32 %v2062, 1.442695
      %v2105 = vpow.pop %v2104
      %v2106 = vmul.f32 %v2063, 1.442695
      %v2107 = vpow.pop %v2106
      %v2108 = vmul.f32 %v2064, 1.442695
      %v2109 = vpow.pop %v2108
      %v2110 = vmul.f32 %v2065, 1.442695
      %v2111 = vpow.pop %v2110
      %v2112 = vmul.f32 %v2066, 1.442695
      %v2113 = vpow.pop %v2112
      %v2114 = vmul.f32 %v2067, 1.442695
      %v2115 = vpow.pop %v2114
      %v2116 = vmul.f32 %v2068, 1.442695
      %v2117 = vpow.pop %v2116
      %v2118 = vmul.f32 %v2069, 1.442695
      %v2119 = vpow.pop %v2118
      %v2120 = vmul.f32 %v2070, 1.442695
      %v2121 = vpow.pop %v2120
      %v2122 = vmul.f32 %v2071, 1.442695
      %v2123 = vpow.pop %v2122
      %v2124 = vmul.f32 %v2072, 1.442695
      %v2125 = vpow.pop %v2124
      %v2126 = vmul.f32 %v2073, 1.442695
      %v2127 = vpow.pop %v2126
      %v2128 = vmul.f32 %v2074, 1.442695
      %v2129 = vpow.pop %v2128
      %v2130 = vmul.f32 %v2075, 1.442695
      %v2131 = vpow.pop %v2130
      %v2132 = vmul.f32 %v2076, 1.442695
      %v2133 = vpow.pop %v2132
      %v2134 = vmul.f32 %v2077, 1.442695
      %v2135 = vpow.pop %v2134
      %v2136 = vmul.f32 %v2078, 1.442695
      %v2137 = vpow.pop %v2136
      %v2138 = vmul.f32 %v2079, 1.442695
      %v2139 = vpow.pop %v2138
      %v2140 = vmul.f32 %v2080, 1.442695
      %v2141 = vpow.pop %v2140
      %v2142 = vmul.f32 %v2081, 1.442695
      %v2143 = vpow.pop %v2142
      %v2144 = vmul.f32 %v2082, 1.442695
      %v2145 = vpow.pop %v2144
      %v2146 = vmul.f32 %v2083, 1.442695
      %v2147 = vpow.pop %v2146
      %v2148 = vpack.c.bf16 %v2089, %v2085
      %v2149 = vpack.c.bf16 %v2091, %v2087
      %v2150 = vpack.c.bf16 %v2097, %v2093
      %v2151 = vpack.c.bf16 %v2099, %v2095
      %v2152 = vpack.c.bf16 %v2105, %v2101
      %v2153 = vpack.c.bf16 %v2107, %v2103
      %v2154 = vpack.c.bf16 %v2113, %v2109
      %v2155 = vpack.c.bf16 %v2115, %v2111
      %v2156 = vpack.c.bf16 %v2121, %v2117
      %v2157 = vpack.c.bf16 %v2123, %v2119
      %v2158 = vpack.c.bf16 %v2129, %v2125
      %v2159 = vpack.c.bf16 %v2131, %v2127
      %v2160 = vpack.c.bf16 %v2137, %v2133
      %v2161 = vpack.c.bf16 %v2139, %v2135
      %v2162 = vpack.c.bf16 %v2145, %v2141
      %v2163 = vpack.c.bf16 %v2147, %v2143
      %2164 = vmatprep.subr.bf16.mxu0 %v2149
      %2165 = vmatpush1.bf16.xpose.msra.mxu0 %v2148
      %2166 = vmatprep.subr.bf16.mxu0 %v2151
      %2167 = vmatpush1.bf16.xpose.msra.mxu0 %v2150
      %2168 = vmatprep.subr.bf16.mxu0 %v2153
      %2169 = vmatpush1.bf16.xpose.msra.mxu0 %v2152
      %2170 = vmatprep.subr.bf16.mxu0 %v2155
      %2171 = vmatpush1.bf16.xpose.msra.mxu0 %v2154
      %2172 = vmatprep.subr.bf16.mxu0 %v2157
      %2173 = vmatpush1.bf16.xpose.msra.mxu0 %v2156
      %2174 = vmatprep.subr.bf16.mxu0 %v2159
      %2175 = vmatpush1.bf16.xpose.msra.mxu0 %v2158
      %2176 = vmatprep.subr.bf16.mxu0 %v2161
      %2177 = vmatpush1.bf16.xpose.msra.mxu0 %v2160
      %2178 = vmatprep.subr.bf16.mxu0 %v2163
      %2179 = vmatpush1.bf16.xpose.msra.mxu0 %v2162
      %2180 = vmatprep.subr.bf16.mxu0 0
      %2181 = vmatpush1.bf16.xpose.msra.mxu0 0
      %2182 = vmatprep.subr.bf16.mxu0 0
      %2183 = vmatpush1.bf16.xpose.msra.mxu0 0
      %2184 = vmatprep.subr.bf16.mxu0 0
      %2185 = vmatpush1.bf16.xpose.msra.mxu0 0
      %2186 = vmatprep.subr.bf16.mxu0 0
      %2187 = vmatpush1.bf16.xpose.msra.mxu0 0
      %2188 = vmatprep.subr.bf16.mxu0 0
      %2189 = vmatpush1.bf16.xpose.msra.mxu0 0
      %2190 = vmatprep.subr.bf16.mxu0 0
      %2191 = vmatpush1.bf16.xpose.msra.mxu0 0
      %2192 = vmatprep.subr.bf16.mxu0 0
      %2193 = vmatpush1.bf16.xpose.msra.mxu0 0
      %2194 = vmatprep.subr.bf16.mxu0 0
      %2195 = vmatpush1.bf16.xpose.msra.mxu0 0
      %2196 = vmatprep.mubr.bf16.mxu0 %v1429
      %2197 = vmatmul.mubr.bf16.gmra.mrb[0].mxu0 %v1428
      %v2198 = vpop.f32.mrb[0].mxu0
      %v2199 = vadd.f32 0.0, %v2198
      %v2200 = vpop.f32.mrb[0].mxu0
      %v2201 = vpop.f32.mrb[0].mxu0
      %v2202 = vpop.f32.mrb[0].mxu0
      %2203 = vdwg.mxu0
      %2204 = vmatprep.subr.bf16.mxu0 %v2149
      %2205 = vmatpush1.bf16.xpose.msra.mxu0 %v2148
      %2206 = vmatprep.subr.bf16.mxu0 %v2151
      %2207 = vmatpush1.bf16.xpose.msra.mxu0 %v2150
      %2208 = vmatprep.subr.bf16.mxu0 %v2153
      %2209 = vmatpush1.bf16.xpose.msra.mxu0 %v2152
      %2210 = vmatprep.subr.bf16.mxu0 %v2155
      %2211 = vmatpush1.bf16.xpose.msra.mxu0 %v2154
      %2212 = vmatprep.subr.bf16.mxu0 %v2157
      %2213 = vmatpush1.bf16.xpose.msra.mxu0 %v2156
      %2214 = vmatprep.subr.bf16.mxu0 %v2159
      %2215 = vmatpush1.bf16.xpose.msra.mxu0 %v2158
      %2216 = vmatprep.subr.bf16.mxu0 %v2161
      %2217 = vmatpush1.bf16.xpose.msra.mxu0 %v2160
      %2218 = vmatprep.subr.bf16.mxu0 %v2163
      %2219 = vmatpush1.bf16.xpose.msra.mxu0 %v2162
      %2220 = vmatprep.subr.bf16.mxu0 0
      %2221 = vmatpush1.bf16.xpose.msra.mxu0 0
      %2222 = vmatprep.subr.bf16.mxu0 0
      %2223 = vmatpush1.bf16.xpose.msra.mxu0 0
      %2224 = vmatprep.subr.bf16.mxu0 0
      %2225 = vmatpush1.bf16.xpose.msra.mxu0 0
      %2226 = vmatprep.subr.bf16.mxu0 0
      %2227 = vmatpush1.bf16.xpose.msra.mxu0 0
      %2228 = vmatprep.subr.bf16.mxu0 0
      %2229 = vmatpush1.bf16.xpose.msra.mxu0 0
      %2230 = vmatprep.subr.bf16.mxu0 0
      %2231 = vmatpush1.bf16.xpose.msra.mxu0 0
      %2232 = vmatprep.subr.bf16.mxu0 0
      %2233 = vmatpush1.bf16.xpose.msra.mxu0 0
      %2234 = vmatprep.subr.bf16.mxu0 0
      %2235 = vmatpush1.bf16.xpose.msra.mxu0 0
      %2236 = vmatprep.mubr.bf16.mxu0 1065369472
      %2237 = vmatmul.mubr.bf16.gmra.mrb[0].mxu0 1065369472
      %v2238 = vpop.f32.mrb[0].mxu0
      %v2239 = vadd.f32 0.0, %v2238
      %v2240 = vpop.f32.mrb[0].mxu0
      %v2241 = vpop.f32.mrb[0].mxu0
      %v2242 = vpop.f32.mrb[0].mxu0
      %2243 = vdwg.mxu0
      %v2244 = vrcp.pop %v2239
      %v2245 = vlaneseq
      %v2246 = vshrl.u32 %v2245, 7
      %v2247 = vsub.s32 0, %v2246
      %v2248 = vrot.slane %v2244, %v2247
      %v2249 = vmul.f32 %v2199, %v2248
      %v2250 = vld [vmem:[%s4] sm:$0xff]
      %v2251 = vld [vmem:[%s4 + $0x8] sm:$0xff]
      %vm2252 = vcmask 130048
      %v2254 = vsel %vm2252, %v2250, 0
      %v2257 = vsel %vm2252, %v2251, 0
      %2259 = vmatprep.subr.mxu0 %v1425
      %2260 = vmatpush1.msra.mxu0 %v1034
      %2261 = vmatprep.subr.mxu0 %v2249
      %2262 = vmatpush1.msra.mxu0 %v1842
      %2263 = vmatprep.subr.mxu0 0.0
      %2264 = vmatpush1.msra.mxu0 0.0
      %2265 = vmatprep.subr.mxu0 0.0
      %2266 = vmatpush1.msra.mxu0 0.0
      %2267 = vmatprep.subr.mxu0 0.0
      %2268 = vmatpush1.msra.mxu0 0.0
      %2269 = vmatprep.subr.mxu0 0.0
      %2270 = vmatpush1.msra.mxu0 0.0
      %2271 = vmatprep.subr.mxu0 0.0
      %2272 = vmatpush1.msra.mxu0 0.0
      %2273 = vmatprep.subr.mxu0 0.0
      %2274 = vmatpush1.msra.mxu0 0.0
      %2275 = vmatprep.subr.mxu0 0.0
      %2276 = vmatpush1.msra.mxu0 0.0
      %2277 = vmatprep.subr.mxu0 0.0
      %2278 = vmatpush1.msra.mxu0 0.0
      %2279 = vmatprep.subr.mxu0 0.0
      %2280 = vmatpush1.msra.mxu0 0.0
      %2281 = vmatprep.subr.mxu0 0.0
      %2282 = vmatpush1.msra.mxu0 0.0
      %2283 = vmatprep.subr.mxu0 0.0
      %2284 = vmatpush1.msra.mxu0 0.0
      %2285 = vmatprep.subr.mxu0 0.0
      %2286 = vmatpush1.msra.mxu0 0.0
      %2287 = vmatprep.subr.mxu0 0.0
      %2288 = vmatpush1.msra.mxu0 0.0
      %2289 = vmatprep.subr.mxu0 0.0
      %2290 = vmatpush1.msra.mxu0 0.0
      %2291 = vmatprep.subr.mxu0 0.0
      %2292 = vmatpush1.msra.mxu0 0.0
      %2293 = vmatprep.subr.mxu0 0.0
      %2294 = vmatpush1.msra.mxu0 0.0
      %2295 = vmatprep.subr.mxu0 0.0
      %2296 = vmatpush1.msra.mxu0 0.0
      %2297 = vmatprep.subr.mxu0 0.0
      %2298 = vmatpush1.msra.mxu0 0.0
      %2299 = vmatprep.subr.mxu0 0.0
      %2300 = vmatpush1.msra.mxu0 0.0
      %2301 = vmatprep.subr.mxu0 0.0
      %2302 = vmatpush1.msra.mxu0 0.0
      %2303 = vmatprep.subr.mxu0 0.0
      %2304 = vmatpush1.msra.mxu0 0.0
      %2305 = vmatprep.subr.mxu0 0.0
      %2306 = vmatpush1.msra.mxu0 0.0
      %2307 = vmatprep.subr.mxu0 0.0
      %2308 = vmatpush1.msra.mxu0 0.0
      %2309 = vmatprep.subr.mxu0 0.0
      %2310 = vmatpush1.msra.mxu0 0.0
      %2311 = vmatprep.subr.mxu0 0.0
      %2312 = vmatpush1.msra.mxu0 0.0
      %2313 = vmatprep.subr.mxu0 0.0
      %2314 = vmatpush1.msra.mxu0 0.0
      %2315 = vmatprep.subr.mxu0 0.0
      %2316 = vmatpush1.msra.mxu0 0.0
      %2317 = vmatprep.subr.mxu0 0.0
      %2318 = vmatpush1.msra.mxu0 0.0
      %2319 = vmatprep.subr.mxu0 0.0
      %2320 = vmatpush1.msra.mxu0 0.0
      %2321 = vmatprep.subr.mxu0 0.0
      %2322 = vmatpush1.msra.mxu0 0.0
      %2323 = vmatprep.mubr.f32.mxu0 0.0
      %2324 = vmatmul.mubr.f32.gmra.mrb[0].mxu0 %v2254
      %v2325 = vpop.f32.mrb[0].mxu0
      %v2326 = vadd.f32 0.0, %v2325
      %v2327 = vpop.f32.mrb[0].mxu0
      %v2328 = vadd.f32 0.0, %v2327
      %2329 = vmatprep.mubr.f32.mxu0 0.0
      %2330 = vmatmul.mubr.f32.gmra.mrb[0].mxu0 %v2257
      %v2331 = vpop.f32.mrb[0].mxu0
      %v2332 = vadd.f32 0.0, %v2331
      %v2333 = vpop.f32.mrb[0].mxu0
      %v2334 = vadd.f32 0.0, %v2333
      %2335 = vdwg.mxu0
      %v2336 = vadd.f32 %v559, %v2326
      %v2337 = vadd.f32 %v561, %v2328
      %v2338 = vadd.f32 %v565, %v2332
      %v2339 = vadd.f32 %v567, %v2334
      %v2340 = vld [vmem:[%s5] sm:$0xff]
      %v2341 = vld [vmem:[%s5 + $0x8] sm:$0xff]
      %2343 = vset.pattern.permute.xlu0 0
      %2344 = vperm.xlu0 %2343, %v2340
      %v2345 = vpop.permute.xlu0 %2344
      %2348 = vset.pattern.permute.xlu0 0
      %2349 = vperm.xlu0 %2348, %v2341
      %v2350 = vpop.permute.xlu0 %2349
      %v2352 = vadd.f32 %v2336, %v2345
      %v2353 = vadd.f32 %v2337, %v2345
      %v2354 = vadd.f32 %v2338, %v2350
      %v2355 = vadd.f32 %v2339, %v2350
      %v2356 = vadd.f32 %v2352, %v2354
      %v2357 = vrot.slane %v2356, 4
      %v2358 = vadd.f32 %v2356, %v2357
      %v2359 = vrot.slane %v2358, 2
      %v2360 = vadd.f32 %v2358, %v2359
      %v2361 = vrot.slane %v2360, 1
      %v2362 = vadd.f32 %v2360, %v2361
      %v2363 = vadd.f32 %v2353, %v2355
      %v2364 = vrot.slane %v2363, 4
      %v2365 = vadd.f32 %v2363, %v2364
      %v2366 = vrot.slane %v2365, 2
      %v2367 = vadd.f32 %v2365, %v2366
      %v2368 = vrot.slane %v2367, 1
      %v2369 = vadd.f32 %v2367, %v2368
      %v2370 = vrcp.pop 16.0
      %v2371 = vmul.f32 %v2362, %v2370
      %v2372 = vmul.f32 %v2369, %v2370
      %v2373 = vsub.f32 %v2352, %v2371
      %v2374 = vsub.f32 %v2353, %v2372
      %v2375 = vsub.f32 %v2354, %v2371
      %v2376 = vsub.f32 %v2355, %v2372
      %v2377 = vmul.f32 %v2373, %v2373
      %v2378 = vmul.f32 %v2374, %v2374
      %v2379 = vmul.f32 %v2375, %v2375
      %v2380 = vmul.f32 %v2376, %v2376
      %v2381 = vadd.f32 %v2377, %v2379
      %v2382 = vrot.slane %v2381, 4
      %v2383 = vadd.f32 %v2381, %v2382
      %v2384 = vrot.slane %v2383, 2
      %v2385 = vadd.f32 %v2383, %v2384
      %v2386 = vrot.slane %v2385, 1
      %v2387 = vadd.f32 %v2385, %v2386
      %v2388 = vadd.f32 %v2378, %v2380
      %v2389 = vrot.slane %v2388, 4
      %v2390 = vadd.f32 %v2388, %v2389
      %v2391 = vrot.slane %v2390, 2
      %v2392 = vadd.f32 %v2390, %v2391
      %v2393 = vrot.slane %v2392, 1
      %v2394 = vadd.f32 %v2392, %v2393
      %v2395 = vmul.f32 %v2387, %v2370
      %v2396 = vmul.f32 %v2394, %v2370
      %v2397 = vadd.f32 %v2395, 1e-05
      %v2398 = vadd.f32 %v2396, 1e-05
      %v2399 = vrsqrt.pop %v2397
      %v2400 = vrsqrt.pop %v2398
      %v2401 = vmul.f32 %v2373, %v2399
      %v2402 = vmul.f32 %v2374, %v2400
      %v2403 = vmul.f32 %v2375, %v2399
      %v2404 = vmul.f32 %v2376, %v2400
      %v2405 = vld [vmem:[%s6] sm:$0xff]
      %v2406 = vld [vmem:[%s6 + $0x8] sm:$0xff]
      %v2407 = vld [vmem:[%s7] sm:$0xff]
      %v2408 = vld [vmem:[%s7 + $0x8] sm:$0xff]
      %2410 = vset.pattern.permute.xlu0 0
      %2411 = vperm.xlu0 %2410, %v2407
      %v2412 = vpop.permute.xlu0 %2411
      %2415 = vset.pattern.permute.xlu0 0
      %2416 = vperm.xlu0 %2415, %v2408
      %v2417 = vpop.permute.xlu0 %2416
      %v2420 = vsel %vm2252, %v2405, 0
      %v2423 = vsel %vm2252, %v2406, 0
      %2425 = vmatprep.subr.mxu0 %v2402
      %2426 = vmatpush1.msra.mxu0 %v2401
      %2427 = vmatprep.subr.mxu0 %v2404
      %2428 = vmatpush1.msra.mxu0 %v2403
      %2429 = vmatprep.subr.mxu0 0.0
      %2430 = vmatpush1.msra.mxu0 0.0
      %2431 = vmatprep.subr.mxu0 0.0
      %2432 = vmatpush1.msra.mxu0 0.0
      %2433 = vmatprep.subr.mxu0 0.0
      %2434 = vmatpush1.msra.mxu0 0.0
      %2435 = vmatprep.subr.mxu0 0.0
      %2436 = vmatpush1.msra.mxu0 0.0
      %2437 = vmatprep.subr.mxu0 0.0
      %2438 = vmatpush1.msra.mxu0 0.0
      %2439 = vmatprep.subr.mxu0 0.0
      %2440 = vmatpush1.msra.mxu0 0.0
      %2441 = vmatprep.subr.mxu0 0.0
      %2442 = vmatpush1.msra.mxu0 0.0
      %2443 = vmatprep.subr.mxu0 0.0
      %2444 = vmatpush1.msra.mxu0 0.0
      %2445 = vmatprep.subr.mxu0 0.0
      %2446 = vmatpush1.msra.mxu0 0.0
      %2447 = vmatprep.subr.mxu0 0.0
      %2448 = vmatpush1.msra.mxu0 0.0
      %2449 = vmatprep.subr.mxu0 0.0
      %2450 = vmatpush1.msra.mxu0 0.0
      %2451 = vmatprep.subr.mxu0 0.0
      %2452 = vmatpush1.msra.mxu0 0.0
      %2453 = vmatprep.subr.mxu0 0.0
      %2454 = vmatpush1.msra.mxu0 0.0
      %2455 = vmatprep.subr.mxu0 0.0
      %2456 = vmatpush1.msra.mxu0 0.0
      %2457 = vmatprep.subr.mxu0 0.0
      %2458 = vmatpush1.msra.mxu0 0.0
      %2459 = vmatprep.subr.mxu0 0.0
      %2460 = vmatpush1.msra.mxu0 0.0
      %2461 = vmatprep.subr.mxu0 0.0
      %2462 = vmatpush1.msra.mxu0 0.0
      %2463 = vmatprep.subr.mxu0 0.0
      %2464 = vmatpush1.msra.mxu0 0.0
      %2465 = vmatprep.subr.mxu0 0.0
      %2466 = vmatpush1.msra.mxu0 0.0
      %2467 = vmatprep.subr.mxu0 0.0
      %2468 = vmatpush1.msra.mxu0 0.0
      %2469 = vmatprep.subr.mxu0 0.0
      %2470 = vmatpush1.msra.mxu0 0.0
      %2471 = vmatprep.subr.mxu0 0.0
      %2472 = vmatpush1.msra.mxu0 0.0
      %2473 = vmatprep.subr.mxu0 0.0
      %2474 = vmatpush1.msra.mxu0 0.0
      %2475 = vmatprep.subr.mxu0 0.0
      %2476 = vmatpush1.msra.mxu0 0.0
      %2477 = vmatprep.subr.mxu0 0.0
      %2478 = vmatpush1.msra.mxu0 0.0
      %2479 = vmatprep.subr.mxu0 0.0
      %2480 = vmatpush1.msra.mxu0 0.0
      %2481 = vmatprep.subr.mxu0 0.0
      %2482 = vmatpush1.msra.mxu0 0.0
      %2483 = vmatprep.subr.mxu0 0.0
      %2484 = vmatpush1.msra.mxu0 0.0
      %2485 = vmatprep.subr.mxu0 0.0
      %2486 = vmatpush1.msra.mxu0 0.0
      %2487 = vmatprep.subr.mxu0 0.0
      %2488 = vmatpush1.msra.mxu0 0.0
      %2489 = vmatprep.mubr.f32.mxu0 0.0
      %2490 = vmatmul.mubr.f32.gmra.mrb[0].mxu0 %v2420
      %v2491 = vpop.f32.mrb[0].mxu0
      %v2492 = vadd.f32 %v2412, %v2491
      %v2493 = vpop.f32.mrb[0].mxu0
      %v2494 = vadd.f32 %v2412, %v2493
      %2495 = vmatprep.mubr.f32.mxu0 0.0
      %2496 = vmatmul.mubr.f32.gmra.mrb[0].mxu0 %v2423
      %v2497 = vpop.f32.mrb[0].mxu0
      %v2498 = vadd.f32 %v2417, %v2497
      %v2499 = vpop.f32.mrb[0].mxu0
      %v2500 = vadd.f32 %v2417, %v2499
      %2501 = vdwg.mxu0
      %v2502 = vmax.f32 %v2492, 0.0
      %v2503 = vmax.f32 %v2494, 0.0
      %v2504 = vmax.f32 %v2498, 0.0
      %v2505 = vmax.f32 %v2500, 0.0
      %v2506 = vld [vmem:[%s8] sm:$0xff]
      %v2507 = vld [vmem:[%s8 + $0x8] sm:$0xff]
      %v2508 = vld [vmem:[%s9] sm:$0xff]
      %v2509 = vld [vmem:[%s9 + $0x8] sm:$0xff]
      %2511 = vset.pattern.permute.xlu0 0
      %2512 = vperm.xlu0 %2511, %v2508
      %v2513 = vpop.permute.xlu0 %2512
      %2516 = vset.pattern.permute.xlu0 0
      %2517 = vperm.xlu0 %2516, %v2509
      %v2518 = vpop.permute.xlu0 %2517
      %v2521 = vsel %vm2252, %v2506, 0
      %v2524 = vsel %vm2252, %v2507, 0
      %2526 = vmatprep.subr.mxu0 %v2503
      %2527 = vmatpush1.msra.mxu0 %v2502
      %2528 = vmatprep.subr.mxu0 %v2505
      %2529 = vmatpush1.msra.mxu0 %v2504
      %2530 = vmatprep.subr.mxu0 0.0
      %2531 = vmatpush1.msra.mxu0 0.0
      %2532 = vmatprep.subr.mxu0 0.0
      %2533 = vmatpush1.msra.mxu0 0.0
      %2534 = vmatprep.subr.mxu0 0.0
      %2535 = vmatpush1.msra.mxu0 0.0
      %2536 = vmatprep.subr.mxu0 0.0
      %2537 = vmatpush1.msra.mxu0 0.0
      %2538 = vmatprep.subr.mxu0 0.0
      %2539 = vmatpush1.msra.mxu0 0.0
      %2540 = vmatprep.subr.mxu0 0.0
      %2541 = vmatpush1.msra.mxu0 0.0
      %2542 = vmatprep.subr.mxu0 0.0
      %2543 = vmatpush1.msra.mxu0 0.0
      %2544 = vmatprep.subr.mxu0 0.0
      %2545 = vmatpush1.msra.mxu0 0.0
      %2546 = vmatprep.subr.mxu0 0.0
      %2547 = vmatpush1.msra.mxu0 0.0
      %2548 = vmatprep.subr.mxu0 0.0
      %2549 = vmatpush1.msra.mxu0 0.0
      %2550 = vmatprep.subr.mxu0 0.0
      %2551 = vmatpush1.msra.mxu0 0.0
      %2552 = vmatprep.subr.mxu0 0.0
      %2553 = vmatpush1.msra.mxu0 0.0
      %2554 = vmatprep.subr.mxu0 0.0
      %2555 = vmatpush1.msra.mxu0 0.0
      %2556 = vmatprep.subr.mxu0 0.0
      %2557 = vmatpush1.msra.mxu0 0.0
      %2558 = vmatprep.subr.mxu0 0.0
      %2559 = vmatpush1.msra.mxu0 0.0
      %2560 = vmatprep.subr.mxu0 0.0
      %2561 = vmatpush1.msra.mxu0 0.0
      %2562 = vmatprep.subr.mxu0 0.0
      %2563 = vmatpush1.msra.mxu0 0.0
      %2564 = vmatprep.subr.mxu0 0.0
      %2565 = vmatpush1.msra.mxu0 0.0
      %2566 = vmatprep.subr.mxu0 0.0
      %2567 = vmatpush1.msra.mxu0 0.0
      %2568 = vmatprep.subr.mxu0 0.0
      %2569 = vmatpush1.msra.mxu0 0.0
      %2570 = vmatprep.subr.mxu0 0.0
      %2571 = vmatpush1.msra.mxu0 0.0
      %2572 = vmatprep.subr.mxu0 0.0
      %2573 = vmatpush1.msra.mxu0 0.0
      %2574 = vmatprep.subr.mxu0 0.0
      %2575 = vmatpush1.msra.mxu0 0.0
      %2576 = vmatprep.subr.mxu0 0.0
      %2577 = vmatpush1.msra.mxu0 0.0
      %2578 = vmatprep.subr.mxu0 0.0
      %2579 = vmatpush1.msra.mxu0 0.0
      %2580 = vmatprep.subr.mxu0 0.0
      %2581 = vmatpush1.msra.mxu0 0.0
      %2582 = vmatprep.subr.mxu0 0.0
      %2583 = vmatpush1.msra.mxu0 0.0
      %2584 = vmatprep.subr.mxu0 0.0
      %2585 = vmatpush1.msra.mxu0 0.0
      %2586 = vmatprep.subr.mxu0 0.0
      %2587 = vmatpush1.msra.mxu0 0.0
      %2588 = vmatprep.subr.mxu0 0.0
      %2589 = vmatpush1.msra.mxu0 0.0
      %2590 = vmatprep.mubr.f32.mxu0 0.0
      %2591 = vmatmul.mubr.f32.gmra.mrb[0].mxu0 %v2521
      %v2592 = vpop.f32.mrb[0].mxu0
      %v2593 = vadd.f32 %v2513, %v2592
      %v2594 = vpop.f32.mrb[0].mxu0
      %v2595 = vadd.f32 %v2513, %v2594
      %2596 = vmatprep.mubr.f32.mxu0 0.0
      %2597 = vmatmul.mubr.f32.gmra.mrb[0].mxu0 %v2524
      %v2598 = vpop.f32.mrb[0].mxu0
      %v2599 = vadd.f32 %v2518, %v2598
      %v2600 = vpop.f32.mrb[0].mxu0
      %v2601 = vadd.f32 %v2518, %v2600
      %2602 = vdwg.mxu0
      %v2603 = vadd.f32 %v2352, %v2593
      %v2604 = vadd.f32 %v2353, %v2595
      %v2605 = vadd.f32 %v2354, %v2599
      %v2606 = vadd.f32 %v2355, %v2601
      %2607 = vst [vmem:[%s359] sm:$0xff] %v2603
      %2608 = vst [vmem:[%s359 + $0x8] sm:$0xff] %v2604
      %2609 = vst [vmem:[%s359 + $0x10] sm:$0xff] %v2605
      %2610 = vst [vmem:[%s359 + $0x18] sm:$0xff] %v2606
      %p2611 = scmp.lt.s32.totalorder %s21, 1
      %s2612 = scalar_select %p2611, %s21, 1
      %s2613 = smul.addr %s2612, 4
      %s2614 = smul.addr %s2613, 8
      %s2615 = scalar_lea.vmem %s10, %s2614
      // Predicated region
      $region61: #{token_transformer2d_forward.1} parent=59 // pred_check
        %p2616 = pneg %p254
      $region62: #{token_transformer2d_forward.1} parent=59 // pred_check_branch
        %2618 = sbr.rel (%p2616) target = $region64
      $region63: #{token_transformer2d_forward.1} parent=59 // pred_region
        _
      $region64: #{token_transformer2d_forward.1} parent=59 // pred_fallthru
        _
    $region60: #{token_transformer2d_forward.1} parent=5 // pred_fallthru
      _
    %p2619 = scmp.le.s32.totalorder 2, %s16
    // Predicated region
    $region65: #{token_transformer2d_forward.1} parent=5 // pred_check
      %p2620 = pneg %p2619
    $region66: #{token_transformer2d_forward.1} parent=5 // pred_check_branch
      %2622 = sbr.rel (%p2620) target = $region68
    $region67: #{token_transformer2d_forward.1} parent=5 // pred_region
      %s2623 = ssub.s32 %s16, 2
      // Predicated region
      $region69: #{token_transformer2d_forward.1} parent=67 // pred_check
        %p2624 = pneg %p260
      $region70: #{token_transformer2d_forward.1} parent=67 // pred_check_branch
        %2626 = sbr.rel (%p2624) target = $region72
      $region71: #{token_transformer2d_forward.1} parent=67 // pred_region
        %p2627 = scmp.lt.s32.totalorder %s22, 1
        %s2628 = scalar_select %p2627, %s22, 1
        %s2629 = smul.addr %s2628, 4
        %s2630 = smul.addr %s2629, 8
        %s2631 = scalar_lea.vmem %s10, %s2630
      $region72: #{token_transformer2d_forward.1} parent=67 // pred_fallthru
        _
    $region68: #{token_transformer2d_forward.1} parent=5 // pred_fallthru
      _
  $region6: #{token_transformer2d_forward.1} parent=0 // loop_footer
    %s20 = sadd.s32 1, %s16
  $region7: #{token_transformer2d_forward.1} parent=0 // loop_footer_branch
    %15 = sbr.rel target = $region3
  $region8: #{token_transformer2d_forward.1} parent=0 // loop_exit
    _

</llo_original>
